<compile_context>
chip_gen: v6e
topology: v6e:2x2x1
jax: 0.10.0
libtpu: 0.0.40
codegen_flags: <defaults>
</compile_context>

<pallas_src>
import jax
import jax.numpy as jnp
import numpy as np
from jax import lax
from jax.experimental import pallas as pl
from jax.experimental.pallas import tpu as pltpu


def attention_pooling_kernel(batch_row_ref, x_ref, w_ref, qmat_ref,
                             expand_ref, gamma_ref, beta_ref, out_ref,
                             gmax_sc, gsum_sc, acc_sc):
    t = pl.program_id(0)
    num_t = pl.num_programs(0)
    B, HD = out_ref.shape
    H = gmax_sc.shape[1]
    tile_n = x_ref.shape[0]
    neg_big = jnp.float32(-1e30)

    @pl.when(t == 0)
    def _init():
        gmax_sc[...] = jnp.full(gmax_sc.shape, neg_big, jnp.float32)
        gsum_sc[...] = jnp.zeros(gsum_sc.shape, jnp.float32)
        acc_sc[...] = jnp.zeros(acc_sc.shape, jnp.float32)

    x = x_ref[...]                                              # (tile_n, in_dim) bf16
    # Dominant matmul: bf16 operands, f32 accumulation on the MXU.
    keys = jnp.dot(x, w_ref[...], preferred_element_type=jnp.float32)      # (tile_n, HD)
    # att = (keys.reshape(n, H, D) * query).sum(-1) as a single f32 matmul
    # against the block-diagonal query matrix (no f32 upcast of x, no extra
    # resident operand; matches the reference reduction).
    att = jnp.dot(keys, qmat_ref[...], preferred_element_type=jnp.float32)  # (tile_n, H)

    batch_row = batch_row_ref[...]                              # (1, tile_n) int32
    # One-hot graph-membership mask.  Padded nodes carry graph id B and match
    # no row; their x rows are zero, so att = 0 and e = exp(0) stays finite
    # (required: 0-mask * non-finite would still give NaN through the matmul).
    mask_b = lax.broadcasted_iota(jnp.int32, (B, tile_n), 0) == batch_row   # (B, tile_n) bool
    mask = mask_b.astype(jnp.float32)                                        # (B, tile_n)
    maskT = mask.T                                                           # (tile_n, B), tiny XLU transpose

    # Per-(graph, head) max over this tile; lanes carry tile_n for the reduce.
    scores = jnp.where(mask_b[:, None, :], att.T[None, :, :], neg_big)       # (B, H, tile_n)
    tmax = jnp.max(scores, axis=-1)                                          # (B, H)

    gmax_old = gmax_sc[...]
    gmax_new = jnp.maximum(gmax_old, tmax)
    alpha = jnp.exp(gmax_old - gmax_new)                                     # (B, H) rescale

    # Gather the running max back to the nodes with a one-hot matmul.
    nmax = jnp.dot(maskT, gmax_new, preferred_element_type=jnp.float32)      # (tile_n, H)
    e = jnp.exp(att - nmax)                                                  # (tile_n, H)

    gsum_sc[...] = alpha * gsum_sc[...] + jnp.dot(
        mask, e, preferred_element_type=jnp.float32)                         # (B, H)

    # Replicate per-head scalars across that head's D lanes (one-hot matmul).
    e_exp = jnp.dot(e, expand_ref[...], preferred_element_type=jnp.float32)          # (tile_n, HD)
    alpha_exp = jnp.dot(alpha, expand_ref[...], preferred_element_type=jnp.float32)  # (B, HD)
    # Keep this reduction in f32: its operand carries the softmax numerators.
    acc_sc[...] = alpha_exp * acc_sc[...] + jnp.dot(
        mask, e_exp * keys, preferred_element_type=jnp.float32)                      # (B, HD)
    gmax_sc[...] = gmax_new

    @pl.when(t == num_t - 1)
    def _finalize():
        denom = jnp.dot(gsum_sc[...], expand_ref[...],
                        preferred_element_type=jnp.float32)                  # (B, HD)
        # Single normalization at the end; empty graphs -> pooled = 0 -> beta.
        denom = jnp.where(denom > 0.0, denom, 1.0)
        pooled = acc_sc[...] * pl.reciprocal(denom, approx=False)
        # LayerNorm over the last dim (eps = 1e-5, affine), biased variance.
        mean = jnp.mean(pooled, axis=-1, keepdims=True)
        cen = pooled - mean
        var = jnp.mean(cen * cen, axis=-1, keepdims=True)
        inv = lax.rsqrt(var + jnp.float32(1e-5))
        out_ref[...] = cen * inv * gamma_ref[...] + beta_ref[...]


def _vmem_limit_bytes(tile_n, in_dim, H, D, B):
    """Scoped-VMEM budget.

    Counts the double-buffered per-tile streams, the single-buffered
    grid-invariant operands, the output block, the accumulator scratch, AND the
    compiler-allocated f32 temporaries inside the kernel body (keys, e_exp,
    e_exp*keys, scores, masks).  No blanket fudge factor; ~25% + 4 MiB headroom
    for compiler-internal scratch.  Cap kept <= 56 MiB so the limit is valid on
    v7x (64 MiB physical VMEM); v5e/v6e (128 MiB) can raise it further.
    """
    hd = H * D

    def padded(rows, cols, elem_bytes=4):
        return (pl.cdiv(rows, 8) * 8) * (pl.cdiv(cols, 128) * 128) * elem_bytes

    # Streamed per-tile operands (double-buffered by the pipeline).
    stream = 2 * (padded(tile_n, in_dim, 2)       # x tile (bf16)
                  + padded(1, tile_n, 4))         # batch-id row tile (int32)
    # Grid-invariant operands (single-buffered via pl.Buffered(1)).
    const = (padded(in_dim, hd, 2)                # w (bf16)
             + padded(hd, H, 4)                   # qmat (f32)
             + padded(H, hd, 4)                   # expand
             + 2 * padded(1, hd, 4))              # gamma, beta
    out_blk = 2 * padded(B, hd, 4)                # output block
    scratch = 2 * padded(B, H, 4) + padded(B, hd, 4)
    # In-kernel f32 temporaries.
    temps = (3 * padded(tile_n, hd, 4)            # keys, e_exp, e_exp*keys
             + 4 * padded(tile_n, H, 4)           # att, nmax, e, att-nmax
             + 2 * padded(B * H, tile_n, 4)       # scores + where operand
             + 3 * padded(B, tile_n, 4)           # mask_b, mask, att.T staging
             + padded(tile_n, B, 4))              # maskT
    total = stream + const + out_blk + scratch + temps
    budget = total + total // 4 + (4 << 20)
    return int(min(max(budget, 16 << 20), 56 << 20))


def attention_pooling(x, batch, w, query, gamma, beta, num_graphs, *, tile_n=2048):
    """x: (N, in_dim) f32, batch: (N,) int32 in [0, num_graphs).

    tile_n: N-tile size (multiple of 128).  Default 2048; use the same (large)
    value on v5e / v6e / v7x — VMEM is nowhere near binding at these operand
    sizes and per-grid-step overhead dominates at small tiles.  It is clamped
    to the 128-padded problem size so small problems run in one grid step.
    """
    N, in_dim = x.shape
    H, D = query.shape
    HD = H * D

    tile_n = max(128, (tile_n // 128) * 128)
    tile_n = min(tile_n, pl.cdiv(N, 128) * 128)
    n_pad = pl.cdiv(N, tile_n) * tile_n
    grid = (n_pad // tile_n,)

    # Pad nodes with ZEROS (finite values are required by mask-by-matmul) and an
    # out-of-range graph id so they are masked out of every graph.
    x_p = jnp.pad(x.astype(jnp.float32), ((0, n_pad - N), (0, 0)))
    batch_p = jnp.pad(batch.astype(jnp.int32), (0, n_pad - N),
                      constant_values=num_graphs)

    x_bf16 = x_p.astype(jnp.bfloat16)
    w_bf16 = w.astype(jnp.bfloat16)

    eye = jnp.eye(H, dtype=jnp.float32)
    # qmat[h*D + d, h'] = query[h, d] * (h == h')  ->  att = keys @ qmat.
    qmat = (query.astype(jnp.float32)[:, :, None] * eye[:, None, :]).reshape(HD, H)
    # expand[h, h'*D + d] = (h == h')  -> lane replication of per-head scalars.
    expand = jnp.broadcast_to(eye[:, :, None], (H, H, D)).reshape(H, HD)

    batch_row = batch_p.reshape(1, n_pad)
    gamma2d = gamma.reshape(1, HD).astype(jnp.float32)
    beta2d = beta.reshape(1, HD).astype(jnp.float32)

    def invariant(shape):
        # Constant index_map -> fetched once; single-buffer to halve its VMEM.
        return pl.BlockSpec(shape, lambda i: (0, 0),
                            pipeline_mode=pl.Buffered(buffer_count=1))

    grid_spec = pltpu.PrefetchScalarGridSpec(
        num_scalar_prefetch=0,
        grid=grid,
        in_specs=[
            pl.BlockSpec((1, tile_n), lambda i: (0, i)),        # batch ids (row layout)
            # If profiling on v5e shows exposed DMA on this stream at large
            # tile_n, bump to pipeline_mode=pl.Buffered(3).
            pl.BlockSpec((tile_n, in_dim), lambda i: (i, 0)),   # x tile (bf16)
            invariant((in_dim, HD)),                            # w (bf16)
            invariant((HD, H)),                                 # qmat (f32)
            invariant((H, HD)),                                 # expand
            invariant((1, HD)),                                 # gamma
            invariant((1, HD)),                                 # beta
        ],
        out_specs=pl.BlockSpec((num_graphs, HD), lambda i: (0, 0)),
        scratch_shapes=[
            pltpu.VMEM((num_graphs, H), jnp.float32),   # running per-graph max
            pltpu.VMEM((num_graphs, H), jnp.float32),   # running per-graph sum
            pltpu.VMEM((num_graphs, HD), jnp.float32),  # running pooled
        ],
    )

    return pl.pallas_call(
        attention_pooling_kernel,
        out_shape=jax.ShapeDtypeStruct((num_graphs, HD), jnp.float32),
        grid_spec=grid_spec,
        compiler_params=pltpu.CompilerParams(
            dimension_semantics=("arbitrary",),     # N-axis is a reduction
            vmem_limit_bytes=_vmem_limit_bytes(tile_n, in_dim, H, D, num_graphs),
        ),
    )(batch_row, x_bf16, w_bf16, qmat, expand, gamma2d, beta2d)


def reference_forward(x, batch, w, query, gamma, beta, num_graphs):
    """Pure-JAX reference mirroring the torch module (eval mode).

    Uses the same bf16-input / f32-accumulation policy for the projection as
    the kernel, so the comparison isolates the segment-softmax / pooling /
    LayerNorm logic.
    """
    N, _ = x.shape
    H, D = query.shape
    keys = jnp.dot(x.astype(jnp.bfloat16), w.astype(jnp.bfloat16),
                   preferred_element_type=jnp.float32).reshape(N, H, D)
    att = (keys * query[None].astype(jnp.float32)).sum(-1)     # (N, H)
    pooled_outs = []
    for h in range(H):
        a = att[:, h]
        m = jax.ops.segment_max(a, batch, num_segments=num_graphs)
        e = jnp.exp(a - m[batch])
        s = jax.ops.segment_sum(e, batch, num_segments=num_graphs)
        attn = e / s[batch]
        pooled = jax.ops.segment_sum(attn[:, None] * keys[:, h, :],
                                     batch, num_segments=num_graphs)
        pooled_outs.append(pooled)
    pooled_cat = jnp.concatenate(pooled_outs, axis=-1)          # (B, H*D)
    mean = pooled_cat.mean(-1, keepdims=True)
    var = ((pooled_cat - mean) ** 2).mean(-1, keepdims=True)
    return (pooled_cat - mean) * lax.rsqrt(var + 1e-5) * gamma[None] + beta[None]


if __name__ == "__main__":
    # Module defaults: heads=4, att_dim=64 -> HD=256 (lane-dense output).
    # N=300 nodes over B=3 graphs.
    N, in_dim, heads, att_dim, B = 300, 64, 4, 64, 3
    HD = heads * att_dim

    key = jax.random.PRNGKey(0)
    k_x, k_w, k_q, k_g, k_b = jax.random.split(key, 5)

    x = jax.random.normal(k_x, (N, in_dim), dtype=jnp.float32)
    batch = jnp.concatenate([
        jnp.full((120,), 0, jnp.int32),
        jnp.full((100,), 1, jnp.int32),
        jnp.full((80,), 2, jnp.int32),
    ])

    # proj: xavier_uniform on a (HD, in_dim) torch weight; stored as (in_dim, HD).
    limit = float(np.sqrt(6.0 / (in_dim + HD)))
    w = jax.random.uniform(k_w, (in_dim, HD), minval=-limit, maxval=limit,
                           dtype=jnp.float32)
    query = jax.random.normal(k_q, (heads, att_dim), dtype=jnp.float32)
    gamma = 1.0 + 0.05 * jax.random.normal(k_g, (HD,), dtype=jnp.float32)
    beta = 0.05 * jax.random.normal(k_b, (HD,), dtype=jnp.float32)

    ref = reference_forward(x, batch, w, query, gamma, beta, B)

    # Default (large) tile: N clamps to one grid step.
    out_big = attention_pooling(x, batch, w, query, gamma, beta, B)
    out_big = jax.block_until_ready(out_big)
    np.testing.assert_allclose(np.asarray(out_big), np.asarray(ref),
                               rtol=1e-4, atol=1e-4)

    # Small tile (3 grid steps, graphs span tile boundaries) exercises the
    # online-softmax rescaling path.
    out_small = attention_pooling(x, batch, w, query, gamma, beta, B, tile_n=128)
    out_small = jax.block_until_ready(out_small)
    np.testing.assert_allclose(np.asarray(out_small), np.asarray(ref),
                               rtol=1e-4, atol=1e-4)

    print("KERNEL_OK")
</pallas_src>

<mosaic_0001>
module attributes {stable_mosaic.version = 11 : i64} {
  func.func @attention_pooling_kernel(%arg0: i32, %arg1: memref<1x384xi32, #tpu.memory_space<vmem>>, %arg2: memref<384x64xbf16, #tpu.memory_space<vmem>>, %arg3: memref<64x256xbf16, #tpu.memory_space<vmem>>, %arg4: memref<256x4xf32, #tpu.memory_space<vmem>>, %arg5: memref<4x256xf32, #tpu.memory_space<vmem>>, %arg6: memref<1x256xf32, #tpu.memory_space<vmem>>, %arg7: memref<1x256xf32, #tpu.memory_space<vmem>>, %arg8: memref<3x256xf32, #tpu.memory_space<vmem>>, %arg9: memref<3x4xf32, #tpu.memory_space<vmem>>, %arg10: memref<3x4xf32, #tpu.memory_space<vmem>>, %arg11: memref<3x256xf32, #tpu.memory_space<vmem>>) attributes {dimension_semantics = [#tpu.dimension_semantics<arbitrary>], iteration_bounds = array<i64: 1>, scalar_prefetch = 0 : i64, scratch_operands = 3 : i64, tpu.core_type = #tpu.core_type<tc>, window_params = [{transform_indices = @transform_0, window_bounds = array<i64: 1, 384>}, {transform_indices = @transform_1, window_bounds = array<i64: 384, 64>}, {pipeline_mode = #tpu.pipeline_mode<synchronous>, transform_indices = @transform_2, window_bounds = array<i64: 64, 256>}, {pipeline_mode = #tpu.pipeline_mode<synchronous>, transform_indices = @transform_3, window_bounds = array<i64: 256, 4>}, {pipeline_mode = #tpu.pipeline_mode<synchronous>, transform_indices = @transform_4, window_bounds = array<i64: 4, 256>}, {pipeline_mode = #tpu.pipeline_mode<synchronous>, transform_indices = @transform_5, window_bounds = array<i64: 1, 256>}, {pipeline_mode = #tpu.pipeline_mode<synchronous>, transform_indices = @transform_6, window_bounds = array<i64: 1, 256>}, {pipeline_mode = #tpu.pipeline_mode<synchronous>, transform_indices = @transform_7, window_bounds = array<i64: 3, 256>}]} {
    %c0_i32 = arith.constant 0 : i32
    %0 = arith.cmpi eq, %arg0, %c0_i32 : i32
    %1 = arith.extui %0 : i1 to i32
    %cst = arith.constant -1.000000e+30 : f32
    %c0_i32_0 = arith.constant 0 : i32
    %2 = arith.cmpi ne, %1, %c0_i32_0 : i32
    scf.if %2 {
      %51 = vector.broadcast %cst : f32 to vector<3x4xf32>
      %c0_35 = arith.constant 0 : index
      %c0_36 = arith.constant 0 : index
      %52 = vector.load %arg9[%c0_35, %c0_36] : memref<3x4xf32, #tpu.memory_space<vmem>>, vector<3x4xf32>
      tpu.vector_store %arg9[%c0_35, %c0_36], %51 {strides = array<i32>} : memref<3x4xf32, #tpu.memory_space<vmem>>, vector<3x4xf32>,
      %cst_37 = arith.constant 0.000000e+00 : f32
      %53 = vector.broadcast %cst_37 : f32 to vector<3x4xf32>
      %c0_38 = arith.constant 0 : index
      %c0_39 = arith.constant 0 : index
      %54 = vector.load %arg10[%c0_38, %c0_39] : memref<3x4xf32, #tpu.memory_space<vmem>>, vector<3x4xf32>
      tpu.vector_store %arg10[%c0_38, %c0_39], %53 {strides = array<i32>} : memref<3x4xf32, #tpu.memory_space<vmem>>, vector<3x4xf32>,
      %cst_40 = arith.constant 0.000000e+00 : f32
      %55 = vector.broadcast %cst_40 : f32 to vector<3x256xf32>
      %c0_41 = arith.constant 0 : index
      %c0_42 = arith.constant 0 : index
      %56 = vector.load %arg11[%c0_41, %c0_42] : memref<3x256xf32, #tpu.memory_space<vmem>>, vector<3x256xf32>
      tpu.vector_store %arg11[%c0_41, %c0_42], %55 {strides = array<i32>} : memref<3x256xf32, #tpu.memory_space<vmem>>, vector<3x256xf32>,
    } else {
    }
    %c0 = arith.constant 0 : index
    %c0_1 = arith.constant 0 : index
    %3 = vector.load %arg2[%c0, %c0_1] : memref<384x64xbf16, #tpu.memory_space<vmem>>, vector<384x64xbf16>
    %c0_2 = arith.constant 0 : index
    %c0_3 = arith.constant 0 : index
    %4 = vector.load %arg3[%c0_2, %c0_3] : memref<64x256xbf16, #tpu.memory_space<vmem>>, vector<64x256xbf16>
    %cst_4 = arith.constant dense<0.000000e+00> : vector<384x256xf32>
    %5 = tpu.matmul %3, %4, %cst_4 {dimension_numbers = #tpu.dot_dimension_numbers<[1], [0], [0], [1], [0, 0, 1, 1], [], []>} : vector<384x64xbf16>, vector<64x256xbf16>, vector<384x256xf32> -> vector<384x256xf32>
    %c0_5 = arith.constant 0 : index
    %c0_6 = arith.constant 0 : index
    %6 = vector.load %arg4[%c0_5, %c0_6] : memref<256x4xf32, #tpu.memory_space<vmem>>, vector<256x4xf32>
    %cst_7 = arith.constant dense<0.000000e+00> : vector<384x4xf32>
    %7 = tpu.matmul %5, %6, %cst_7 {dimension_numbers = #tpu.dot_dimension_numbers<[1], [0], [0], [1], [0, 0, 1, 1], [], []>} : vector<384x256xf32>, vector<256x4xf32>, vector<384x4xf32> -> vector<384x4xf32>
    %c0_8 = arith.constant 0 : index
    %c0_9 = arith.constant 0 : index
    %8 = vector.load %arg1[%c0_8, %c0_9] : memref<1x384xi32, #tpu.memory_space<vmem>>, vector<1x384xi32>
    %9 = tpu.iota {dimensions = array<i32: 0>} : vector<3x384xi32>
    %10 = vector.broadcast %8 : vector<1x384xi32> to vector<3x384xi32>
    %11 = arith.cmpi eq, %9, %10 : vector<3x384xi32>
    %12 = arith.extui %11 : vector<3x384xi1> to vector<3x384xi32>
    %13 = arith.sitofp %12 : vector<3x384xi32> to vector<3x384xf32>
    %14 = tpu.transpose %13, [1, 0] : vector<3x384xf32> -> vector<384x3xf32>
    %15 = vector.shape_cast %11 : vector<3x384xi1> to vector<3x1x384xi1>
    %16 = tpu.transpose %7, [1, 0] : vector<384x4xf32> -> vector<4x384xf32>
    %17 = vector.shape_cast %16 : vector<4x384xf32> to vector<1x4x384xf32>
    %cst_10 = arith.constant -1.000000e+30 : f32
    %18 = vector.shape_cast %15 : vector<3x1x384xi1> to vector<3x1x384xi1>
    %19 = vector.broadcast %18 : vector<3x1x384xi1> to vector<3x4x384xi1>
    %20 = vector.shape_cast %17 : vector<1x4x384xf32> to vector<1x4x384xf32>
    %21 = vector.broadcast %20 : vector<1x4x384xf32> to vector<3x4x384xf32>
    %22 = vector.broadcast %cst_10 : f32 to vector<3x4x384xf32>
    %23 = arith.select %19, %21, %22 : vector<3x4x384xi1>, vector<3x4x384xf32>
    %cst_11 = arith.constant dense<0xFF800000> : vector<3x4xf32>
    %24 = vector.multi_reduction <maximumf>, %23, %cst_11 [2] : vector<3x4x384xf32> to vector<3x4xf32>
    %c0_12 = arith.constant 0 : index
    %c0_13 = arith.constant 0 : index
    %25 = vector.load %arg9[%c0_12, %c0_13] : memref<3x4xf32, #tpu.memory_space<vmem>>, vector<3x4xf32>
    %26 = arith.maximumf %25, %24 : vector<3x4xf32>
    %27 = arith.subf %25, %26 : vector<3x4xf32>
    %28 = math.exp %27 : vector<3x4xf32>
    %cst_14 = arith.constant dense<0.000000e+00> : vector<384x4xf32>
    %29 = tpu.matmul %14, %26, %cst_14 {dimension_numbers = #tpu.dot_dimension_numbers<[1], [0], [0], [1], [0, 0, 1, 1], [], []>} : vector<384x3xf32>, vector<3x4xf32>, vector<384x4xf32> -> vector<384x4xf32>
    %30 = arith.subf %7, %29 : vector<384x4xf32>
    %31 = math.exp %30 : vector<384x4xf32>
    %c0_15 = arith.constant 0 : index
    %c0_16 = arith.constant 0 : index
    %32 = vector.load %arg10[%c0_15, %c0_16] : memref<3x4xf32, #tpu.memory_space<vmem>>, vector<3x4xf32>
    %33 = arith.mulf %28, %32 : vector<3x4xf32>
    %cst_17 = arith.constant dense<0.000000e+00> : vector<3x4xf32>
    %34 = tpu.matmul %13, %31, %cst_17 {dimension_numbers = #tpu.dot_dimension_numbers<[1], [0], [0], [1], [0, 0, 1, 1], [], []>} : vector<3x384xf32>, vector<384x4xf32>, vector<3x4xf32> -> vector<3x4xf32>
    %35 = arith.addf %33, %34 : vector<3x4xf32>
    %c0_18 = arith.constant 0 : index
    %c0_19 = arith.constant 0 : index
    %36 = vector.load %arg10[%c0_18, %c0_19] : memref<3x4xf32, #tpu.memory_space<vmem>>, vector<3x4xf32>
    tpu.vector_store %arg10[%c0_18, %c0_19], %35 {strides = array<i32>} : memref<3x4xf32, #tpu.memory_space<vmem>>, vector<3x4xf32>,
    %c0_20 = arith.constant 0 : index
    %c0_21 = arith.constant 0 : index
    %37 = vector.load %arg5[%c0_20, %c0_21] : memref<4x256xf32, #tpu.memory_space<vmem>>, vector<4x256xf32>
    %cst_22 = arith.constant dense<0.000000e+00> : vector<384x256xf32>
    %38 = tpu.matmul %31, %37, %cst_22 {dimension_numbers = #tpu.dot_dimension_numbers<[1], [0], [0], [1], [0, 0, 1, 1], [], []>} : vector<384x4xf32>, vector<4x256xf32>, vector<384x256xf32> -> vector<384x256xf32>
    %c0_23 = arith.constant 0 : index
    %c0_24 = arith.constant 0 : index
    %39 = vector.load %arg5[%c0_23, %c0_24] : memref<4x256xf32, #tpu.memory_space<vmem>>, vector<4x256xf32>
    %cst_25 = arith.constant dense<0.000000e+00> : vector<3x256xf32>
    %40 = tpu.matmul %28, %39, %cst_25 {dimension_numbers = #tpu.dot_dimension_numbers<[1], [0], [0], [1], [0, 0, 1, 1], [], []>} : vector<3x4xf32>, vector<4x256xf32>, vector<3x256xf32> -> vector<3x256xf32>
    %c0_26 = arith.constant 0 : index
    %c0_27 = arith.constant 0 : index
    %41 = vector.load %arg11[%c0_26, %c0_27] : memref<3x256xf32, #tpu.memory_space<vmem>>, vector<3x256xf32>
    %42 = arith.mulf %40, %41 : vector<3x256xf32>
    %43 = arith.mulf %38, %5 : vector<384x256xf32>
    %cst_28 = arith.constant dense<0.000000e+00> : vector<3x256xf32>
    %44 = tpu.matmul %13, %43, %cst_28 {dimension_numbers = #tpu.dot_dimension_numbers<[1], [0], [0], [1], [0, 0, 1, 1], [], []>} : vector<3x384xf32>, vector<384x256xf32>, vector<3x256xf32> -> vector<3x256xf32>
    %45 = arith.addf %42, %44 : vector<3x256xf32>
    %c0_29 = arith.constant 0 : index
    %c0_30 = arith.constant 0 : index
    %46 = vector.load %arg11[%c0_29, %c0_30] : memref<3x256xf32, #tpu.memory_space<vmem>>, vector<3x256xf32>
    tpu.vector_store %arg11[%c0_29, %c0_30], %45 {strides = array<i32>} : memref<3x256xf32, #tpu.memory_space<vmem>>, vector<3x256xf32>,
    %c0_31 = arith.constant 0 : index
    %c0_32 = arith.constant 0 : index
    %47 = vector.load %arg9[%c0_31, %c0_32] : memref<3x4xf32, #tpu.memory_space<vmem>>, vector<3x4xf32>
    tpu.vector_store %arg9[%c0_31, %c0_32], %26 {strides = array<i32>} : memref<3x4xf32, #tpu.memory_space<vmem>>, vector<3x4xf32>,
    %c0_i32_33 = arith.constant 0 : i32
    %48 = arith.cmpi eq, %arg0, %c0_i32_33 : i32
    %49 = arith.extui %48 : i1 to i32
    %c0_i32_34 = arith.constant 0 : i32
    %50 = arith.cmpi ne, %49, %c0_i32_34 : i32
    scf.if %50 {
      %c0_35 = arith.constant 0 : index
      %c0_36 = arith.constant 0 : index
      %51 = vector.load %arg10[%c0_35, %c0_36] : memref<3x4xf32, #tpu.memory_space<vmem>>, vector<3x4xf32>
      %c0_37 = arith.constant 0 : index
      %c0_38 = arith.constant 0 : index
      %52 = vector.load %arg5[%c0_37, %c0_38] : memref<4x256xf32, #tpu.memory_space<vmem>>, vector<4x256xf32>
      %cst_39 = arith.constant dense<0.000000e+00> : vector<3x256xf32>
      %53 = tpu.matmul %51, %52, %cst_39 {dimension_numbers = #tpu.dot_dimension_numbers<[1], [0], [0], [1], [0, 0, 1, 1], [], []>} : vector<3x4xf32>, vector<4x256xf32>, vector<3x256xf32> -> vector<3x256xf32>
      %cst_40 = arith.constant 0.000000e+00 : f32
      %54 = vector.broadcast %cst_40 : f32 to vector<3x256xf32>
      %55 = arith.cmpf ogt, %53, %54 : vector<3x256xf32>
      %cst_41 = arith.constant 1.000000e+00 : f32
      %56 = vector.broadcast %cst_41 : f32 to vector<3x256xf32>
      %57 = arith.select %55, %53, %56 : vector<3x256xi1>, vector<3x256xf32>
      %c0_42 = arith.constant 0 : index
      %c0_43 = arith.constant 0 : index
      %58 = vector.load %arg11[%c0_42, %c0_43] : memref<3x256xf32, #tpu.memory_space<vmem>>, vector<3x256xf32>
      %59 = tpu.reciprocal %57 : vector<3x256xf32> -> vector<3x256xf32>
      %60 = arith.mulf %58, %59 : vector<3x256xf32>
      %cst_44 = arith.constant dense<0.000000e+00> : vector<3xf32>
      %61 = vector.multi_reduction <add>, %60, %cst_44 [1] : vector<3x256xf32> to vector<3xf32>
      %62 = vector.shape_cast %61 : vector<3xf32> to vector<3x1xf32>
      %cst_45 = arith.constant 2.560000e+02 : f32
      %63 = vector.broadcast %cst_45 : f32 to vector<3x1xf32>
      %64 = arith.divf %62, %63 : vector<3x1xf32>
      %65 = vector.broadcast %64 : vector<3x1xf32> to vector<3x256xf32>
      %66 = arith.subf %60, %65 : vector<3x256xf32>
      %67 = arith.mulf %66, %66 : vector<3x256xf32>
      %cst_46 = arith.constant dense<0.000000e+00> : vector<3xf32>
      %68 = vector.multi_reduction <add>, %67, %cst_46 [1] : vector<3x256xf32> to vector<3xf32>
      %69 = vector.shape_cast %68 : vector<3xf32> to vector<3x1xf32>
      %cst_47 = arith.constant 2.560000e+02 : f32
      %70 = vector.broadcast %cst_47 : f32 to vector<3x1xf32>
      %71 = arith.divf %69, %70 : vector<3x1xf32>
      %cst_48 = arith.constant 9.99999974E-6 : f32
      %72 = vector.broadcast %cst_48 : f32 to vector<3x1xf32>
      %73 = arith.addf %71, %72 : vector<3x1xf32>
      %74 = math.rsqrt %73 : vector<3x1xf32>
      %75 = vector.broadcast %74 : vector<3x1xf32> to vector<3x256xf32>
      %76 = arith.mulf %66, %75 : vector<3x256xf32>
      %c0_49 = arith.constant 0 : index
      %c0_50 = arith.constant 0 : index
      %77 = vector.load %arg6[%c0_49, %c0_50] : memref<1x256xf32, #tpu.memory_space<vmem>>, vector<1x256xf32>
      %78 = vector.broadcast %77 : vector<1x256xf32> to vector<3x256xf32>
      %79 = arith.mulf %76, %78 : vector<3x256xf32>
      %c0_51 = arith.constant 0 : index
      %c0_52 = arith.constant 0 : index
      %80 = vector.load %arg7[%c0_51, %c0_52] : memref<1x256xf32, #tpu.memory_space<vmem>>, vector<1x256xf32>
      %81 = vector.broadcast %80 : vector<1x256xf32> to vector<3x256xf32>
      %82 = arith.addf %79, %81 : vector<3x256xf32>
      %c0_53 = arith.constant 0 : index
      %c0_54 = arith.constant 0 : index
      %83 = vector.load %arg8[%c0_53, %c0_54] : memref<3x256xf32, #tpu.memory_space<vmem>>, vector<3x256xf32>
      tpu.vector_store %arg8[%c0_53, %c0_54], %82 {strides = array<i32>} : memref<3x256xf32, #tpu.memory_space<vmem>>, vector<3x256xf32>,
    } else {
    }
    return
  }
  func.func @transform_0(%arg0: i32) -> (i32, i32) {
    %c0_i32 = arith.constant 0 : i32
    %c0_i32_0 = arith.constant 0 : i32
    return %c0_i32, %arg0 : i32, i32
  }
  func.func @transform_1(%arg0: i32) -> (i32, i32) {
    %c0_i32 = arith.constant 0 : i32
    %c0_i32_0 = arith.constant 0 : i32
    return %arg0, %c0_i32 : i32, i32
  }
  func.func @transform_2(%arg0: i32) -> (i32, i32) {
    %c0_i32 = arith.constant 0 : i32
    %c0_i32_0 = arith.constant 0 : i32
    %c0_i32_1 = arith.constant 0 : i32
    return %c0_i32, %c0_i32_0 : i32, i32
  }
  func.func @transform_3(%arg0: i32) -> (i32, i32) {
    %c0_i32 = arith.constant 0 : i32
    %c0_i32_0 = arith.constant 0 : i32
    %c0_i32_1 = arith.constant 0 : i32
    return %c0_i32, %c0_i32_0 : i32, i32
  }
  func.func @transform_4(%arg0: i32) -> (i32, i32) {
    %c0_i32 = arith.constant 0 : i32
    %c0_i32_0 = arith.constant 0 : i32
    %c0_i32_1 = arith.constant 0 : i32
    return %c0_i32, %c0_i32_0 : i32, i32
  }
  func.func @transform_5(%arg0: i32) -> (i32, i32) {
    %c0_i32 = arith.constant 0 : i32
    %c0_i32_0 = arith.constant 0 : i32
    %c0_i32_1 = arith.constant 0 : i32
    return %c0_i32, %c0_i32_0 : i32, i32
  }
  func.func @transform_6(%arg0: i32) -> (i32, i32) {
    %c0_i32 = arith.constant 0 : i32
    %c0_i32_0 = arith.constant 0 : i32
    %c0_i32_1 = arith.constant 0 : i32
    return %c0_i32, %c0_i32_0 : i32, i32
  }
  func.func @transform_7(%arg0: i32) -> (i32, i32) {
    %c0_i32 = arith.constant 0 : i32
    %c0_i32_0 = arith.constant 0 : i32
    %c0_i32_1 = arith.constant 0 : i32
    return %c0_i32, %c0_i32_0 : i32, i32
  }
}

</mosaic_0001>

<llo_original>
// kernel: tpu_custom_call.1
$region0: #{tpu_custom_call.1}
  #allocation0 [shape = 'u32[]', space=smem, size = 0x4, offset = 0x4, fixed_abs, tag = 'smem constant byte address 0x4 - core index']
  #allocation1 [shape = 'u32[144,128]{1,0:T(1,128)}', space=vmem, size = 0x12000, scoped, tag = 'internal scratch']
  #allocation2 [shape = 'f32[3,4]{1,0:T(4,128)}', space=vmem, size = 0x800, scoped, tag = 'scratch operand']
  #allocation3 [shape = 'f32[3,4]{1,0:T(4,128)}', space=vmem, size = 0x800, scoped, tag = 'scratch operand']
  #allocation4 [shape = 'f32[3,256]{1,0:T(4,128)}', space=vmem, size = 0x1000, scoped, tag = 'scratch operand']
  %s0 = inlined_call_operand.vmem [shape: s32[1,384], index: 0, kind: input, shape index: {}]
  %s1 = inlined_call_operand.vmem [shape: bf16[384,64], index: 1, kind: input, shape index: {}]
  %s2 = inlined_call_operand.vmem [shape: bf16[64,256], index: 2, kind: input, shape index: {}]
  %s3 = inlined_call_operand.vmem [shape: f32[256,4], index: 3, kind: input, shape index: {}]
  %s4 = inlined_call_operand.vmem [shape: f32[4,256], index: 4, kind: input, shape index: {}]
  %s5 = inlined_call_operand.vmem [shape: f32[1,256], index: 5, kind: input, shape index: {}]
  %s6 = inlined_call_operand.vmem [shape: f32[1,256], index: 6, kind: input, shape index: {}]
  %s7 = inlined_call_operand.hbm [shape: f32[3,256], index: 7, kind: output, shape index: {}]
  %s8 = sld [smem:[#allocation0]]
  $region46: #{tpu_custom_call.1} parent=0
    _
  %s10 = ssub.s32 1, %s8
  %s11 = scalar_select 0, %s10, %s8
  $region1: #{tpu_custom_call.1} parent=0
    #allocation5 [shape = 'u8[4096]{0}', space=vmem, size = 0x1000, scoped, tag = 'output window, operand 0, single buffered']
    #allocation6 [shape = 's32[1]{0}', space=sflag, size = 0x4, scoped, tag = 'scoped memory for tpu_custom_call.1']
    %12 = vsyncpa [#allocation6], 0
    // Predicated region
    $region2: #{tpu_custom_call.1} parent=1 // pred_check
      _
    $region3: #{tpu_custom_call.1} parent=1 // pred_check_branch
      %14 = sbr.rel (0) target = $region5
    $region4: #{tpu_custom_call.1} parent=1 // pred_region
      _
    $region5: #{tpu_custom_call.1} parent=1 // pred_fallthru
      _
    // Predicated region
    $region6: #{tpu_custom_call.1} parent=1 // pred_check
      _
    $region7: #{tpu_custom_call.1} parent=1 // pred_check_branch
      %16 = sbr.rel (0) target = $region9
    $region8: #{tpu_custom_call.1} parent=1 // pred_region
      _
    $region9: #{tpu_custom_call.1} parent=1 // pred_fallthru
      _
    // Predicated region
    $region10: #{tpu_custom_call.1} parent=1 // pred_check
      _
    $region11: #{tpu_custom_call.1} parent=1 // pred_check_branch
      %18 = sbr.rel (0) target = $region13
    $region12: #{tpu_custom_call.1} parent=1 // pred_region
      _
    $region13: #{tpu_custom_call.1} parent=1 // pred_fallthru
      _
    // Predicated region
    $region14: #{tpu_custom_call.1} parent=1 // pred_check
      _
    $region15: #{tpu_custom_call.1} parent=1 // pred_check_branch
      %20 = sbr.rel (0) target = $region17
    $region16: #{tpu_custom_call.1} parent=1 // pred_region
      _
    $region17: #{tpu_custom_call.1} parent=1 // pred_fallthru
      _
    // Predicated region
    $region18: #{tpu_custom_call.1} parent=1 // pred_check
      _
    $region19: #{tpu_custom_call.1} parent=1 // pred_check_branch
      %22 = sbr.rel (0) target = $region21
    $region20: #{tpu_custom_call.1} parent=1 // pred_region
      _
    $region21: #{tpu_custom_call.1} parent=1 // pred_fallthru
      _
    // Predicated region
    $region22: #{tpu_custom_call.1} parent=1 // pred_check
      _
    $region23: #{tpu_custom_call.1} parent=1 // pred_check_branch
      %24 = sbr.rel (0) target = $region25
    $region24: #{tpu_custom_call.1} parent=1 // pred_region
      _
    $region25: #{tpu_custom_call.1} parent=1 // pred_fallthru
      _
    // Predicated region
    $region26: #{tpu_custom_call.1} parent=1 // pred_check
      _
    $region27: #{tpu_custom_call.1} parent=1 // pred_check_branch
      %26 = sbr.rel (0) target = $region29
    $region28: #{tpu_custom_call.1} parent=1 // pred_region
      _
    $region29: #{tpu_custom_call.1} parent=1 // pred_fallthru
      _
    %p28 = scmp.eq.s32.totalorder 0, 0
    // Predicated region
    $region30: #{tpu_custom_call.1} parent=1 // pred_check
      %p29 = pneg %p28
    $region31: #{tpu_custom_call.1} parent=1 // pred_check_branch
      %31 = sbr.rel (%p29) target = $region33
    $region32: #{tpu_custom_call.1} parent=1 // pred_region
      %vm32 = vcmask 26624
      %33 = vst.msk [vmem:[#allocation2] sm:$0x7] %vm32, -1e+30
      %34 = vst.msk [vmem:[#allocation3] sm:$0x7] %vm32, 0.0
      %35 = vst [vmem:[#allocation4] sm:$0x77] 0.0
    $region33: #{tpu_custom_call.1} parent=1 // pred_fallthru
      _
    %v36 = vld [vmem:[%s1] sm:$0xf]
    %v37 = vld [vmem:[%s1 + $0x4] sm:$0xf]
    %v38 = vld [vmem:[%s1 + $0x8] sm:$0xf]
    %v39 = vld [vmem:[%s1 + $0xc] sm:$0xf]
    %v40 = vld [vmem:[%s1 + $0x10] sm:$0xf]
    %v41 = vld [vmem:[%s1 + $0x14] sm:$0xf]
    %v42 = vld [vmem:[%s1 + $0x18] sm:$0xf]
    %v43 = vld [vmem:[%s1 + $0x1c] sm:$0xf]
    %v44 = vld [vmem:[%s1 + $0x20] sm:$0xf]
    %v45 = vld [vmem:[%s1 + $0x24] sm:$0xf]
    %v46 = vld [vmem:[%s1 + $0x28] sm:$0xf]
    %v47 = vld [vmem:[%s1 + $0x2c] sm:$0xf]
    %v48 = vld [vmem:[%s1 + $0x30] sm:$0xf]
    %v49 = vld [vmem:[%s1 + $0x34] sm:$0xf]
    %v50 = vld [vmem:[%s1 + $0x38] sm:$0xf]
    %v51 = vld [vmem:[%s1 + $0x3c] sm:$0xf]
    %v52 = vld [vmem:[%s1 + $0x40] sm:$0xf]
    %v53 = vld [vmem:[%s1 + $0x44] sm:$0xf]
    %v54 = vld [vmem:[%s1 + $0x48] sm:$0xf]
    %v55 = vld [vmem:[%s1 + $0x4c] sm:$0xf]
    %v56 = vld [vmem:[%s1 + $0x50] sm:$0xf]
    %v57 = vld [vmem:[%s1 + $0x54] sm:$0xf]
    %v58 = vld [vmem:[%s1 + $0x58] sm:$0xf]
    %v59 = vld [vmem:[%s1 + $0x5c] sm:$0xf]
    %v60 = vld [vmem:[%s1 + $0x60] sm:$0xf]
    %v61 = vld [vmem:[%s1 + $0x64] sm:$0xf]
    %v62 = vld [vmem:[%s1 + $0x68] sm:$0xf]
    %v63 = vld [vmem:[%s1 + $0x6c] sm:$0xf]
    %v64 = vld [vmem:[%s1 + $0x70] sm:$0xf]
    %v65 = vld [vmem:[%s1 + $0x74] sm:$0xf]
    %v66 = vld [vmem:[%s1 + $0x78] sm:$0xf]
    %v67 = vld [vmem:[%s1 + $0x7c] sm:$0xf]
    %v68 = vld [vmem:[%s1 + $0x80] sm:$0xf]
    %v69 = vld [vmem:[%s1 + $0x84] sm:$0xf]
    %v70 = vld [vmem:[%s1 + $0x88] sm:$0xf]
    %v71 = vld [vmem:[%s1 + $0x8c] sm:$0xf]
    %v72 = vld [vmem:[%s1 + $0x90] sm:$0xf]
    %v73 = vld [vmem:[%s1 + $0x94] sm:$0xf]
    %v74 = vld [vmem:[%s1 + $0x98] sm:$0xf]
    %v75 = vld [vmem:[%s1 + $0x9c] sm:$0xf]
    %v76 = vld [vmem:[%s1 + $0xa0] sm:$0xf]
    %v77 = vld [vmem:[%s1 + $0xa4] sm:$0xf]
    %v78 = vld [vmem:[%s1 + $0xa8] sm:$0xf]
    %v79 = vld [vmem:[%s1 + $0xac] sm:$0xf]
    %v80 = vld [vmem:[%s1 + $0xb0] sm:$0xf]
    %v81 = vld [vmem:[%s1 + $0xb4] sm:$0xf]
    %v82 = vld [vmem:[%s1 + $0xb8] sm:$0xf]
    %v83 = vld [vmem:[%s1 + $0xbc] sm:$0xf]
    %v84 = vld [vmem:[%s2] sm:$0xff]
    %v85 = vld [vmem:[%s2 + $0x8] sm:$0xff]
    %v86 = vld [vmem:[%s2 + $0x10] sm:$0xff]
    %v87 = vld [vmem:[%s2 + $0x18] sm:$0xff]
    %v88 = vld [vmem:[%s2 + $0x20] sm:$0xff]
    %v89 = vld [vmem:[%s2 + $0x28] sm:$0xff]
    %v90 = vld [vmem:[%s2 + $0x30] sm:$0xff]
    %v91 = vld [vmem:[%s2 + $0x38] sm:$0xff]
    %v140 = vunpack.c.l.b16 %v36
    %v141 = vunpack.c.l.b16 %v37
    %v142 = vunpack.c.l.b16 %v38
    %v143 = vunpack.c.l.b16 %v39
    %v144 = vunpack.c.l.b16 %v40
    %v145 = vunpack.c.l.b16 %v41
    %v146 = vunpack.c.l.b16 %v42
    %v147 = vunpack.c.l.b16 %v43
    %v148 = vunpack.c.l.b16 %v44
    %v149 = vunpack.c.l.b16 %v45
    %v150 = vunpack.c.l.b16 %v46
    %v151 = vunpack.c.l.b16 %v47
    %v152 = vunpack.c.l.b16 %v48
    %v153 = vunpack.c.l.b16 %v49
    %v154 = vunpack.c.l.b16 %v50
    %v155 = vunpack.c.l.b16 %v51
    %v156 = vunpack.c.l.b16 %v52
    %v157 = vunpack.c.l.b16 %v53
    %v158 = vunpack.c.l.b16 %v54
    %v159 = vunpack.c.l.b16 %v55
    %v160 = vunpack.c.l.b16 %v56
    %v161 = vunpack.c.l.b16 %v57
    %v162 = vunpack.c.l.b16 %v58
    %v163 = vunpack.c.l.b16 %v59
    %v164 = vunpack.c.l.b16 %v60
    %v165 = vunpack.c.l.b16 %v61
    %v166 = vunpack.c.l.b16 %v62
    %v167 = vunpack.c.l.b16 %v63
    %v168 = vunpack.c.l.b16 %v64
    %v169 = vunpack.c.l.b16 %v65
    %v170 = vunpack.c.l.b16 %v66
    %v171 = vunpack.c.l.b16 %v67
    %v172 = vunpack.c.l.b16 %v68
    %v173 = vunpack.c.l.b16 %v69
    %v174 = vunpack.c.l.b16 %v70
    %v175 = vunpack.c.l.b16 %v71
    %v176 = vunpack.c.l.b16 %v72
    %v177 = vunpack.c.l.b16 %v73
    %v178 = vunpack.c.l.b16 %v74
    %v179 = vunpack.c.l.b16 %v75
    %v180 = vunpack.c.l.b16 %v76
    %v181 = vunpack.c.l.b16 %v77
    %v182 = vunpack.c.l.b16 %v78
    %v183 = vunpack.c.l.b16 %v79
    %v184 = vunpack.c.l.b16 %v80
    %v185 = vunpack.c.l.b16 %v81
    %v186 = vunpack.c.l.b16 %v82
    %v187 = vunpack.c.l.b16 %v83
    %v188 = vpack.c.b16 %v141, %v140
    %v189 = vpack.c.b16 %v143, %v142
    %v190 = vpack.c.b16 %v145, %v144
    %v191 = vpack.c.b16 %v147, %v146
    %v192 = vpack.c.b16 %v149, %v148
    %v193 = vpack.c.b16 %v151, %v150
    %v194 = vpack.c.b16 %v153, %v152
    %v195 = vpack.c.b16 %v155, %v154
    %v196 = vpack.c.b16 %v157, %v156
    %v197 = vpack.c.b16 %v159, %v158
    %v198 = vpack.c.b16 %v161, %v160
    %v199 = vpack.c.b16 %v163, %v162
    %v200 = vpack.c.b16 %v165, %v164
    %v201 = vpack.c.b16 %v167, %v166
    %v202 = vpack.c.b16 %v169, %v168
    %v203 = vpack.c.b16 %v171, %v170
    %v204 = vpack.c.b16 %v173, %v172
    %v205 = vpack.c.b16 %v175, %v174
    %v206 = vpack.c.b16 %v177, %v176
    %v207 = vpack.c.b16 %v179, %v178
    %v208 = vpack.c.b16 %v181, %v180
    %v209 = vpack.c.b16 %v183, %v182
    %v210 = vpack.c.b16 %v185, %v184
    %v211 = vpack.c.b16 %v187, %v186
    %v220 = vunpack.c.l.b16 %v84
    %v221 = vunpack.c.h.b16 %v84
    %v222 = vunpack.c.l.b16 %v85
    %v223 = vunpack.c.h.b16 %v85
    %v224 = vunpack.c.l.b16 %v86
    %v225 = vunpack.c.h.b16 %v86
    %v226 = vunpack.c.l.b16 %v87
    %v227 = vunpack.c.h.b16 %v87
    %v228 = vunpack.c.l.b16 %v88
    %v229 = vunpack.c.h.b16 %v88
    %v230 = vunpack.c.l.b16 %v89
    %v231 = vunpack.c.h.b16 %v89
    %v232 = vunpack.c.l.b16 %v90
    %v233 = vunpack.c.h.b16 %v90
    %v234 = vunpack.c.l.b16 %v91
    %v235 = vunpack.c.h.b16 %v91
    %v236 = vpack.c.b16 %v222, %v220
    %v237 = vpack.c.b16 %v223, %v221
    %v238 = vpack.c.b16 %v226, %v224
    %v239 = vpack.c.b16 %v227, %v225
    %v240 = vpack.c.b16 %v230, %v228
    %v241 = vpack.c.b16 %v231, %v229
    %v242 = vpack.c.b16 %v234, %v232
    %v243 = vpack.c.b16 %v235, %v233
    %vm252 = vcmask 523264
    %v254 = vsel %vm252, %v188, 0
    %v257 = vsel %vm252, %v189, 0
    %v260 = vsel %vm252, %v190, 0
    %v263 = vsel %vm252, %v191, 0
    %v266 = vsel %vm252, %v192, 0
    %v269 = vsel %vm252, %v193, 0
    %v272 = vsel %vm252, %v194, 0
    %v275 = vsel %vm252, %v195, 0
    %v278 = vsel %vm252, %v196, 0
    %v281 = vsel %vm252, %v197, 0
    %v284 = vsel %vm252, %v198, 0
    %v287 = vsel %vm252, %v199, 0
    %v290 = vsel %vm252, %v200, 0
    %v293 = vsel %vm252, %v201, 0
    %v296 = vsel %vm252, %v202, 0
    %v299 = vsel %vm252, %v203, 0
    %v302 = vsel %vm252, %v204, 0
    %v305 = vsel %vm252, %v205, 0
    %v308 = vsel %vm252, %v206, 0
    %v311 = vsel %vm252, %v207, 0
    %v314 = vsel %vm252, %v208, 0
    %v317 = vsel %vm252, %v209, 0
    %v320 = vsel %vm252, %v210, 0
    %v323 = vsel %vm252, %v211, 0
    %325 = vmatprep.subr.bf16.mxu0 0
    %326 = vmatpush1.bf16.msra.mxu0 0
    %327 = vmatprep.subr.bf16.mxu0 0
    %328 = vmatpush1.bf16.msra.mxu0 0
    %329 = vmatprep.subr.bf16.mxu0 0
    %330 = vmatpush1.bf16.msra.mxu0 0
    %331 = vmatprep.subr.bf16.mxu0 0
    %332 = vmatpush1.bf16.msra.mxu0 0
    %333 = vmatprep.subr.bf16.mxu0 %v243
    %334 = vmatpush1.bf16.msra.mxu0 %v242
    %335 = vmatprep.subr.bf16.mxu0 %v241
    %336 = vmatpush1.bf16.msra.mxu0 %v240
    %337 = vmatprep.subr.bf16.mxu0 %v239
    %338 = vmatpush1.bf16.msra.mxu0 %v238
    %339 = vmatprep.subr.bf16.mxu0 %v237
    %340 = vmatpush1.bf16.msra.mxu0 %v236
    %341 = vmatprep.subr.bf16.mxu0 0
    %342 = vmatpush2.bf16.msra.mxu0 0
    %343 = vmatprep.subr.bf16.mxu0 0
    %344 = vmatpush2.bf16.msra.mxu0 0
    %345 = vmatprep.subr.bf16.mxu0 0
    %346 = vmatpush2.bf16.msra.mxu0 0
    %347 = vmatprep.subr.bf16.mxu0 0
    %348 = vmatpush2.bf16.msra.mxu0 0
    %349 = vmatprep.subr.bf16.mxu0 0
    %350 = vmatpush2.bf16.msra.mxu0 0
    %351 = vmatprep.subr.bf16.mxu0 0
    %352 = vmatpush2.bf16.msra.mxu0 0
    %353 = vmatprep.subr.bf16.mxu0 0
    %354 = vmatpush2.bf16.msra.mxu0 0
    %355 = vmatprep.subr.bf16.mxu0 0
    %356 = vmatpush2.bf16.msra.mxu0 0
    %357 = vmatprep.mubr.bf16.mxu0 0
    %358 = vmatmul.mubr.bf16.gmra.mxu0 %v254
    %v359 = vpop.f32.mrf.mxu0
    %v360 = vadd.f32 0.0, %v359
    %v361 = vpop.f32.mrf.mxu0
    %v362 = vadd.f32 0.0, %v361
    %v363 = vpop.f32.mrf.mxu0
    %v364 = vadd.f32 0.0, %v363
    %v365 = vpop.f32.mrf.mxu0
    %v366 = vadd.f32 0.0, %v365
    %367 = vmatprep.mubr.bf16.mxu0 0
    %368 = vmatmul.mubr.bf16.gmra.mxu0 %v257
    %v369 = vpop.f32.mrf.mxu0
    %v370 = vadd.f32 0.0, %v369
    %v371 = vpop.f32.mrf.mxu0
    %v372 = vadd.f32 0.0, %v371
    %v373 = vpop.f32.mrf.mxu0
    %v374 = vadd.f32 0.0, %v373
    %v375 = vpop.f32.mrf.mxu0
    %v376 = vadd.f32 0.0, %v375
    %377 = vmatprep.mubr.bf16.mxu0 0
    %378 = vmatmul.mubr.bf16.gmra.mxu0 %v260
    %v379 = vpop.f32.mrf.mxu0
    %v380 = vadd.f32 0.0, %v379
    %v381 = vpop.f32.mrf.mxu0
    %v382 = vadd.f32 0.0, %v381
    %v383 = vpop.f32.mrf.mxu0
    %v384 = vadd.f32 0.0, %v383
    %v385 = vpop.f32.mrf.mxu0
    %v386 = vadd.f32 0.0, %v385
    %387 = vmatprep.mubr.bf16.mxu0 0
    %388 = vmatmul.mubr.bf16.gmra.mxu0 %v263
    %v389 = vpop.f32.mrf.mxu0
    %v390 = vadd.f32 0.0, %v389
    %v391 = vpop.f32.mrf.mxu0
    %v392 = vadd.f32 0.0, %v391
    %v393 = vpop.f32.mrf.mxu0
    %v394 = vadd.f32 0.0, %v393
    %v395 = vpop.f32.mrf.mxu0
    %v396 = vadd.f32 0.0, %v395
    %397 = vmatprep.mubr.bf16.mxu0 0
    %398 = vmatmul.mubr.bf16.gmra.mxu0 %v266
    %v399 = vpop.f32.mrf.mxu0
    %v400 = vadd.f32 0.0, %v399
    %v401 = vpop.f32.mrf.mxu0
    %v402 = vadd.f32 0.0, %v401
    %v403 = vpop.f32.mrf.mxu0
    %v404 = vadd.f32 0.0, %v403
    %v405 = vpop.f32.mrf.mxu0
    %v406 = vadd.f32 0.0, %v405
    %407 = vmatprep.mubr.bf16.mxu0 0
    %408 = vmatmul.mubr.bf16.gmra.mxu0 %v269
    %v409 = vpop.f32.mrf.mxu0
    %v410 = vadd.f32 0.0, %v409
    %v411 = vpop.f32.mrf.mxu0
    %v412 = vadd.f32 0.0, %v411
    %v413 = vpop.f32.mrf.mxu0
    %v414 = vadd.f32 0.0, %v413
    %v415 = vpop.f32.mrf.mxu0
    %v416 = vadd.f32 0.0, %v415
    %417 = vmatprep.mubr.bf16.mxu0 0
    %418 = vmatmul.mubr.bf16.gmra.mxu0 %v272
    %v419 = vpop.f32.mrf.mxu0
    %v420 = vadd.f32 0.0, %v419
    %v421 = vpop.f32.mrf.mxu0
    %v422 = vadd.f32 0.0, %v421
    %v423 = vpop.f32.mrf.mxu0
    %v424 = vadd.f32 0.0, %v423
    %v425 = vpop.f32.mrf.mxu0
    %v426 = vadd.f32 0.0, %v425
    %427 = vmatprep.mubr.bf16.mxu0 0
    %428 = vmatmul.mubr.bf16.gmra.mxu0 %v275
    %v429 = vpop.f32.mrf.mxu0
    %v430 = vadd.f32 0.0, %v429
    %v431 = vpop.f32.mrf.mxu0
    %v432 = vadd.f32 0.0, %v431
    %v433 = vpop.f32.mrf.mxu0
    %v434 = vadd.f32 0.0, %v433
    %v435 = vpop.f32.mrf.mxu0
    %v436 = vadd.f32 0.0, %v435
    %437 = vmatprep.mubr.bf16.mxu0 0
    %438 = vmatmul.mubr.bf16.gmra.mxu0 %v278
    %v439 = vpop.f32.mrf.mxu0
    %v440 = vadd.f32 0.0, %v439
    %v441 = vpop.f32.mrf.mxu0
    %v442 = vadd.f32 0.0, %v441
    %v443 = vpop.f32.mrf.mxu0
    %v444 = vadd.f32 0.0, %v443
    %v445 = vpop.f32.mrf.mxu0
    %v446 = vadd.f32 0.0, %v445
    %447 = vmatprep.mubr.bf16.mxu0 0
    %448 = vmatmul.mubr.bf16.gmra.mxu0 %v281
    %v449 = vpop.f32.mrf.mxu0
    %v450 = vadd.f32 0.0, %v449
    %v451 = vpop.f32.mrf.mxu0
    %v452 = vadd.f32 0.0, %v451
    %v453 = vpop.f32.mrf.mxu0
    %v454 = vadd.f32 0.0, %v453
    %v455 = vpop.f32.mrf.mxu0
    %v456 = vadd.f32 0.0, %v455
    %457 = vmatprep.mubr.bf16.mxu0 0
    %458 = vmatmul.mubr.bf16.gmra.mxu0 %v284
    %v459 = vpop.f32.mrf.mxu0
    %v460 = vadd.f32 0.0, %v459
    %v461 = vpop.f32.mrf.mxu0
    %v462 = vadd.f32 0.0, %v461
    %v463 = vpop.f32.mrf.mxu0
    %v464 = vadd.f32 0.0, %v463
    %v465 = vpop.f32.mrf.mxu0
    %v466 = vadd.f32 0.0, %v465
    %467 = vmatprep.mubr.bf16.mxu0 0
    %468 = vmatmul.mubr.bf16.gmra.mxu0 %v287
    %v469 = vpop.f32.mrf.mxu0
    %v470 = vadd.f32 0.0, %v469
    %v471 = vpop.f32.mrf.mxu0
    %v472 = vadd.f32 0.0, %v471
    %v473 = vpop.f32.mrf.mxu0
    %v474 = vadd.f32 0.0, %v473
    %v475 = vpop.f32.mrf.mxu0
    %v476 = vadd.f32 0.0, %v475
    %477 = vmatprep.mubr.bf16.mxu0 0
    %478 = vmatmul.mubr.bf16.gmra.mxu0 %v290
    %v479 = vpop.f32.mrf.mxu0
    %v480 = vadd.f32 0.0, %v479
    %v481 = vpop.f32.mrf.mxu0
    %v482 = vadd.f32 0.0, %v481
    %v483 = vpop.f32.mrf.mxu0
    %v484 = vadd.f32 0.0, %v483
    %v485 = vpop.f32.mrf.mxu0
    %v486 = vadd.f32 0.0, %v485
    %487 = vmatprep.mubr.bf16.mxu0 0
    %488 = vmatmul.mubr.bf16.gmra.mxu0 %v293
    %v489 = vpop.f32.mrf.mxu0
    %v490 = vadd.f32 0.0, %v489
    %v491 = vpop.f32.mrf.mxu0
    %v492 = vadd.f32 0.0, %v491
    %v493 = vpop.f32.mrf.mxu0
    %v494 = vadd.f32 0.0, %v493
    %v495 = vpop.f32.mrf.mxu0
    %v496 = vadd.f32 0.0, %v495
    %497 = vmatprep.mubr.bf16.mxu0 0
    %498 = vmatmul.mubr.bf16.gmra.mxu0 %v296
    %v499 = vpop.f32.mrf.mxu0
    %v500 = vadd.f32 0.0, %v499
    %v501 = vpop.f32.mrf.mxu0
    %v502 = vadd.f32 0.0, %v501
    %v503 = vpop.f32.mrf.mxu0
    %v504 = vadd.f32 0.0, %v503
    %v505 = vpop.f32.mrf.mxu0
    %v506 = vadd.f32 0.0, %v505
    %507 = vmatprep.mubr.bf16.mxu0 0
    %508 = vmatmul.mubr.bf16.gmra.mxu0 %v299
    %v509 = vpop.f32.mrf.mxu0
    %v510 = vadd.f32 0.0, %v509
    %v511 = vpop.f32.mrf.mxu0
    %v512 = vadd.f32 0.0, %v511
    %v513 = vpop.f32.mrf.mxu0
    %v514 = vadd.f32 0.0, %v513
    %v515 = vpop.f32.mrf.mxu0
    %v516 = vadd.f32 0.0, %v515
    %517 = vmatprep.mubr.bf16.mxu0 0
    %518 = vmatmul.mubr.bf16.gmra.mxu0 %v302
    %v519 = vpop.f32.mrf.mxu0
    %v520 = vadd.f32 0.0, %v519
    %v521 = vpop.f32.mrf.mxu0
    %v522 = vadd.f32 0.0, %v521
    %v523 = vpop.f32.mrf.mxu0
    %v524 = vadd.f32 0.0, %v523
    %v525 = vpop.f32.mrf.mxu0
    %v526 = vadd.f32 0.0, %v525
    %527 = vmatprep.mubr.bf16.mxu0 0
    %528 = vmatmul.mubr.bf16.gmra.mxu0 %v305
    %v529 = vpop.f32.mrf.mxu0
    %v530 = vadd.f32 0.0, %v529
    %v531 = vpop.f32.mrf.mxu0
    %v532 = vadd.f32 0.0, %v531
    %v533 = vpop.f32.mrf.mxu0
    %v534 = vadd.f32 0.0, %v533
    %v535 = vpop.f32.mrf.mxu0
    %v536 = vadd.f32 0.0, %v535
    %537 = vmatprep.mubr.bf16.mxu0 0
    %538 = vmatmul.mubr.bf16.gmra.mxu0 %v308
    %v539 = vpop.f32.mrf.mxu0
    %v540 = vadd.f32 0.0, %v539
    %v541 = vpop.f32.mrf.mxu0
    %v542 = vadd.f32 0.0, %v541
    %v543 = vpop.f32.mrf.mxu0
    %v544 = vadd.f32 0.0, %v543
    %v545 = vpop.f32.mrf.mxu0
    %v546 = vadd.f32 0.0, %v545
    %547 = vmatprep.mubr.bf16.mxu0 0
    %548 = vmatmul.mubr.bf16.gmra.mxu0 %v311
    %v549 = vpop.f32.mrf.mxu0
    %v550 = vadd.f32 0.0, %v549
    %v551 = vpop.f32.mrf.mxu0
    %v552 = vadd.f32 0.0, %v551
    %v553 = vpop.f32.mrf.mxu0
    %v554 = vadd.f32 0.0, %v553
    %v555 = vpop.f32.mrf.mxu0
    %v556 = vadd.f32 0.0, %v555
    %557 = vmatprep.mubr.bf16.mxu0 0
    %558 = vmatmul.mubr.bf16.gmra.mxu0 %v314
    %v559 = vpop.f32.mrf.mxu0
    %v560 = vadd.f32 0.0, %v559
    %v561 = vpop.f32.mrf.mxu0
    %v562 = vadd.f32 0.0, %v561
    %v563 = vpop.f32.mrf.mxu0
    %v564 = vadd.f32 0.0, %v563
    %v565 = vpop.f32.mrf.mxu0
    %v566 = vadd.f32 0.0, %v565
    %567 = vmatprep.mubr.bf16.mxu0 0
    %568 = vmatmul.mubr.bf16.gmra.mxu0 %v317
    %v569 = vpop.f32.mrf.mxu0
    %v570 = vadd.f32 0.0, %v569
    %v571 = vpop.f32.mrf.mxu0
    %v572 = vadd.f32 0.0, %v571
    %v573 = vpop.f32.mrf.mxu0
    %v574 = vadd.f32 0.0, %v573
    %v575 = vpop.f32.mrf.mxu0
    %v576 = vadd.f32 0.0, %v575
    %577 = vmatprep.mubr.bf16.mxu0 0
    %578 = vmatmul.mubr.bf16.gmra.mxu0 %v320
    %v579 = vpop.f32.mrf.mxu0
    %v580 = vadd.f32 0.0, %v579
    %v581 = vpop.f32.mrf.mxu0
    %v582 = vadd.f32 0.0, %v581
    %v583 = vpop.f32.mrf.mxu0
    %v584 = vadd.f32 0.0, %v583
    %v585 = vpop.f32.mrf.mxu0
    %v586 = vadd.f32 0.0, %v585
    %587 = vmatprep.mubr.bf16.mxu0 0
    %588 = vmatmul.mubr.bf16.gmra.mxu0 %v323
    %v589 = vpop.f32.mrf.mxu0
    %v590 = vadd.f32 0.0, %v589
    %v591 = vpop.f32.mrf.mxu0
    %v592 = vadd.f32 0.0, %v591
    %v593 = vpop.f32.mrf.mxu0
    %v594 = vadd.f32 0.0, %v593
    %v595 = vpop.f32.mrf.mxu0
    %v596 = vadd.f32 0.0, %v595
    %597 = vdwg.mxu0
    %v598 = vld [vmem:[%s3] sm:$0xff]
    %v599 = vld [vmem:[%s3 + $0x8] sm:$0xff]
    %v600 = vld [vmem:[%s3 + $0x10] sm:$0xff]
    %v601 = vld [vmem:[%s3 + $0x18] sm:$0xff]
    %v602 = vld [vmem:[%s3 + $0x20] sm:$0xff]
    %v603 = vld [vmem:[%s3 + $0x28] sm:$0xff]
    %v604 = vld [vmem:[%s3 + $0x30] sm:$0xff]
    %v605 = vld [vmem:[%s3 + $0x38] sm:$0xff]
    %v606 = vld [vmem:[%s3 + $0x40] sm:$0xff]
    %v607 = vld [vmem:[%s3 + $0x48] sm:$0xff]
    %v608 = vld [vmem:[%s3 + $0x50] sm:$0xff]
    %v609 = vld [vmem:[%s3 + $0x58] sm:$0xff]
    %v610 = vld [vmem:[%s3 + $0x60] sm:$0xff]
    %v611 = vld [vmem:[%s3 + $0x68] sm:$0xff]
    %v612 = vld [vmem:[%s3 + $0x70] sm:$0xff]
    %v613 = vld [vmem:[%s3 + $0x78] sm:$0xff]
    %v614 = vld [vmem:[%s3 + $0x80] sm:$0xff]
    %v615 = vld [vmem:[%s3 + $0x88] sm:$0xff]
    %v616 = vld [vmem:[%s3 + $0x90] sm:$0xff]
    %v617 = vld [vmem:[%s3 + $0x98] sm:$0xff]
    %v618 = vld [vmem:[%s3 + $0xa0] sm:$0xff]
    %v619 = vld [vmem:[%s3 + $0xa8] sm:$0xff]
    %v620 = vld [vmem:[%s3 + $0xb0] sm:$0xff]
    %v621 = vld [vmem:[%s3 + $0xb8] sm:$0xff]
    %v622 = vld [vmem:[%s3 + $0xc0] sm:$0xff]
    %v623 = vld [vmem:[%s3 + $0xc8] sm:$0xff]
    %v624 = vld [vmem:[%s3 + $0xd0] sm:$0xff]
    %v625 = vld [vmem:[%s3 + $0xd8] sm:$0xff]
    %v626 = vld [vmem:[%s3 + $0xe0] sm:$0xff]
    %v627 = vld [vmem:[%s3 + $0xe8] sm:$0xff]
    %v628 = vld [vmem:[%s3 + $0xf0] sm:$0xff]
    %v629 = vld [vmem:[%s3 + $0xf8] sm:$0xff]
    %630 = vmatprep.subr.mxu0 0.0
    %631 = vmatpush1.msra.mxu0 %v613
    %632 = vmatprep.subr.mxu0 0.0
    %633 = vmatpush1.msra.mxu0 %v612
    %634 = vmatprep.subr.mxu0 0.0
    %635 = vmatpush1.msra.mxu0 %v611
    %636 = vmatprep.subr.mxu0 0.0
    %637 = vmatpush1.msra.mxu0 %v610
    %638 = vmatprep.subr.mxu0 0.0
    %639 = vmatpush1.msra.mxu0 %v609
    %640 = vmatprep.subr.mxu0 0.0
    %641 = vmatpush1.msra.mxu0 %v608
    %642 = vmatprep.subr.mxu0 0.0
    %643 = vmatpush1.msra.mxu0 %v607
    %644 = vmatprep.subr.mxu0 0.0
    %645 = vmatpush1.msra.mxu0 %v606
    %646 = vmatprep.subr.mxu0 0.0
    %647 = vmatpush1.msra.mxu0 %v605
    %648 = vmatprep.subr.mxu0 0.0
    %649 = vmatpush1.msra.mxu0 %v604
    %650 = vmatprep.subr.mxu0 0.0
    %651 = vmatpush1.msra.mxu0 %v603
    %652 = vmatprep.subr.mxu0 0.0
    %653 = vmatpush1.msra.mxu0 %v602
    %654 = vmatprep.subr.mxu0 0.0
    %655 = vmatpush1.msra.mxu0 %v601
    %656 = vmatprep.subr.mxu0 0.0
    %657 = vmatpush1.msra.mxu0 %v600
    %658 = vmatprep.subr.mxu0 0.0
    %659 = vmatpush1.msra.mxu0 %v599
    %660 = vmatprep.subr.mxu0 0.0
    %661 = vmatpush1.msra.mxu0 %v598
    %662 = vmatprep.subr.mxu0 0.0
    %663 = vmatpush2.msra.mxu0 %v629
    %664 = vmatprep.subr.mxu0 0.0
    %665 = vmatpush2.msra.mxu0 %v628
    %666 = vmatprep.subr.mxu0 0.0
    %667 = vmatpush2.msra.mxu0 %v627
    %668 = vmatprep.subr.mxu0 0.0
    %669 = vmatpush2.msra.mxu0 %v626
    %670 = vmatprep.subr.mxu0 0.0
    %671 = vmatpush2.msra.mxu0 %v625
    %672 = vmatprep.subr.mxu0 0.0
    %673 = vmatpush2.msra.mxu0 %v624
    %674 = vmatprep.subr.mxu0 0.0
    %675 = vmatpush2.msra.mxu0 %v623
    %676 = vmatprep.subr.mxu0 0.0
    %677 = vmatpush2.msra.mxu0 %v622
    %678 = vmatprep.subr.mxu0 0.0
    %679 = vmatpush2.msra.mxu0 %v621
    %680 = vmatprep.subr.mxu0 0.0
    %681 = vmatpush2.msra.mxu0 %v620
    %682 = vmatprep.subr.mxu0 0.0
    %683 = vmatpush2.msra.mxu0 %v619
    %684 = vmatprep.subr.mxu0 0.0
    %685 = vmatpush2.msra.mxu0 %v618
    %686 = vmatprep.subr.mxu0 0.0
    %687 = vmatpush2.msra.mxu0 %v617
    %688 = vmatprep.subr.mxu0 0.0
    %689 = vmatpush2.msra.mxu0 %v616
    %690 = vmatprep.subr.mxu0 0.0
    %691 = vmatpush2.msra.mxu0 %v615
    %692 = vmatprep.subr.mxu0 0.0
    %693 = vmatpush2.msra.mxu0 %v614
    %694 = vmatprep.mubr.f32.mxu0 %v362
    %695 = vmatmul.mubr.f32.gmra.mxu0 %v360
    %v696 = vpop.f32.mrf.mxu0
    %v697 = vadd.f32 0.0, %v696
    %v698 = vpop.f32.mrf.mxu0
    %699 = vmatprep.mubr.f32.mxu0 %v366
    %700 = vmatmul.mubr.f32.gmra.mxu0 %v364
    %v701 = vpop.f32.mrf.mxu0
    %v702 = vadd.f32 0.0, %v701
    %v703 = vpop.f32.mrf.mxu0
    %704 = vmatprep.mubr.f32.mxu0 %v372
    %705 = vmatmul.mubr.f32.gmra.mxu0 %v370
    %v706 = vpop.f32.mrf.mxu0
    %v707 = vadd.f32 0.0, %v706
    %v708 = vpop.f32.mrf.mxu0
    %709 = vmatprep.mubr.f32.mxu0 %v376
    %710 = vmatmul.mubr.f32.gmra.mxu0 %v374
    %v711 = vpop.f32.mrf.mxu0
    %v712 = vadd.f32 0.0, %v711
    %v713 = vpop.f32.mrf.mxu0
    %714 = vmatprep.mubr.f32.mxu0 %v382
    %715 = vmatmul.mubr.f32.gmra.mxu0 %v380
    %v716 = vpop.f32.mrf.mxu0
    %v717 = vadd.f32 0.0, %v716
    %v718 = vpop.f32.mrf.mxu0
    %719 = vmatprep.mubr.f32.mxu0 %v386
    %720 = vmatmul.mubr.f32.gmra.mxu0 %v384
    %v721 = vpop.f32.mrf.mxu0
    %v722 = vadd.f32 0.0, %v721
    %v723 = vpop.f32.mrf.mxu0
    %724 = vmatprep.mubr.f32.mxu0 %v392
    %725 = vmatmul.mubr.f32.gmra.mxu0 %v390
    %v726 = vpop.f32.mrf.mxu0
    %v727 = vadd.f32 0.0, %v726
    %v728 = vpop.f32.mrf.mxu0
    %729 = vmatprep.mubr.f32.mxu0 %v396
    %730 = vmatmul.mubr.f32.gmra.mxu0 %v394
    %v731 = vpop.f32.mrf.mxu0
    %v732 = vadd.f32 0.0, %v731
    %v733 = vpop.f32.mrf.mxu0
    %734 = vmatprep.mubr.f32.mxu0 %v402
    %735 = vmatmul.mubr.f32.gmra.mxu0 %v400
    %v736 = vpop.f32.mrf.mxu0
    %v737 = vadd.f32 0.0, %v736
    %v738 = vpop.f32.mrf.mxu0
    %739 = vmatprep.mubr.f32.mxu0 %v406
    %740 = vmatmul.mubr.f32.gmra.mxu0 %v404
    %v741 = vpop.f32.mrf.mxu0
    %v742 = vadd.f32 0.0, %v741
    %v743 = vpop.f32.mrf.mxu0
    %744 = vmatprep.mubr.f32.mxu0 %v412
    %745 = vmatmul.mubr.f32.gmra.mxu0 %v410
    %v746 = vpop.f32.mrf.mxu0
    %v747 = vadd.f32 0.0, %v746
    %v748 = vpop.f32.mrf.mxu0
    %749 = vmatprep.mubr.f32.mxu0 %v416
    %750 = vmatmul.mubr.f32.gmra.mxu0 %v414
    %v751 = vpop.f32.mrf.mxu0
    %v752 = vadd.f32 0.0, %v751
    %v753 = vpop.f32.mrf.mxu0
    %754 = vmatprep.mubr.f32.mxu0 %v422
    %755 = vmatmul.mubr.f32.gmra.mxu0 %v420
    %v756 = vpop.f32.mrf.mxu0
    %v757 = vadd.f32 0.0, %v756
    %v758 = vpop.f32.mrf.mxu0
    %759 = vmatprep.mubr.f32.mxu0 %v426
    %760 = vmatmul.mubr.f32.gmra.mxu0 %v424
    %v761 = vpop.f32.mrf.mxu0
    %v762 = vadd.f32 0.0, %v761
    %v763 = vpop.f32.mrf.mxu0
    %764 = vmatprep.mubr.f32.mxu0 %v432
    %765 = vmatmul.mubr.f32.gmra.mxu0 %v430
    %v766 = vpop.f32.mrf.mxu0
    %v767 = vadd.f32 0.0, %v766
    %v768 = vpop.f32.mrf.mxu0
    %769 = vmatprep.mubr.f32.mxu0 %v436
    %770 = vmatmul.mubr.f32.gmra.mxu0 %v434
    %v771 = vpop.f32.mrf.mxu0
    %v772 = vadd.f32 0.0, %v771
    %v773 = vpop.f32.mrf.mxu0
    %774 = vmatprep.mubr.f32.mxu0 %v442
    %775 = vmatmul.mubr.f32.gmra.mxu0 %v440
    %v776 = vpop.f32.mrf.mxu0
    %v777 = vadd.f32 0.0, %v776
    %v778 = vpop.f32.mrf.mxu0
    %779 = vmatprep.mubr.f32.mxu0 %v446
    %780 = vmatmul.mubr.f32.gmra.mxu0 %v444
    %v781 = vpop.f32.mrf.mxu0
    %v782 = vadd.f32 0.0, %v781
    %v783 = vpop.f32.mrf.mxu0
    %784 = vmatprep.mubr.f32.mxu0 %v452
    %785 = vmatmul.mubr.f32.gmra.mxu0 %v450
    %v786 = vpop.f32.mrf.mxu0
    %v787 = vadd.f32 0.0, %v786
    %v788 = vpop.f32.mrf.mxu0
    %789 = vmatprep.mubr.f32.mxu0 %v456
    %790 = vmatmul.mubr.f32.gmra.mxu0 %v454
    %v791 = vpop.f32.mrf.mxu0
    %v792 = vadd.f32 0.0, %v791
    %v793 = vpop.f32.mrf.mxu0
    %794 = vmatprep.mubr.f32.mxu0 %v462
    %795 = vmatmul.mubr.f32.gmra.mxu0 %v460
    %v796 = vpop.f32.mrf.mxu0
    %v797 = vadd.f32 0.0, %v796
    %v798 = vpop.f32.mrf.mxu0
    %799 = vmatprep.mubr.f32.mxu0 %v466
    %800 = vmatmul.mubr.f32.gmra.mxu0 %v464
    %v801 = vpop.f32.mrf.mxu0
    %v802 = vadd.f32 0.0, %v801
    %v803 = vpop.f32.mrf.mxu0
    %804 = vmatprep.mubr.f32.mxu0 %v472
    %805 = vmatmul.mubr.f32.gmra.mxu0 %v470
    %v806 = vpop.f32.mrf.mxu0
    %v807 = vadd.f32 0.0, %v806
    %v808 = vpop.f32.mrf.mxu0
    %809 = vmatprep.mubr.f32.mxu0 %v476
    %810 = vmatmul.mubr.f32.gmra.mxu0 %v474
    %v811 = vpop.f32.mrf.mxu0
    %v812 = vadd.f32 0.0, %v811
    %v813 = vpop.f32.mrf.mxu0
    %814 = vmatprep.mubr.f32.mxu0 %v482
    %815 = vmatmul.mubr.f32.gmra.mxu0 %v480
    %v816 = vpop.f32.mrf.mxu0
    %v817 = vadd.f32 0.0, %v816
    %v818 = vpop.f32.mrf.mxu0
    %819 = vmatprep.mubr.f32.mxu0 %v486
    %820 = vmatmul.mubr.f32.gmra.mxu0 %v484
    %v821 = vpop.f32.mrf.mxu0
    %v822 = vadd.f32 0.0, %v821
    %v823 = vpop.f32.mrf.mxu0
    %824 = vmatprep.mubr.f32.mxu0 %v492
    %825 = vmatmul.mubr.f32.gmra.mxu0 %v490
    %v826 = vpop.f32.mrf.mxu0
    %v827 = vadd.f32 0.0, %v826
    %v828 = vpop.f32.mrf.mxu0
    %829 = vmatprep.mubr.f32.mxu0 %v496
    %830 = vmatmul.mubr.f32.gmra.mxu0 %v494
    %v831 = vpop.f32.mrf.mxu0
    %v832 = vadd.f32 0.0, %v831
    %v833 = vpop.f32.mrf.mxu0
    %834 = vmatprep.mubr.f32.mxu0 %v502
    %835 = vmatmul.mubr.f32.gmra.mxu0 %v500
    %v836 = vpop.f32.mrf.mxu0
    %v837 = vadd.f32 0.0, %v836
    %v838 = vpop.f32.mrf.mxu0
    %839 = vmatprep.mubr.f32.mxu0 %v506
    %840 = vmatmul.mubr.f32.gmra.mxu0 %v504
    %v841 = vpop.f32.mrf.mxu0
    %v842 = vadd.f32 0.0, %v841
    %v843 = vpop.f32.mrf.mxu0
    %844 = vmatprep.mubr.f32.mxu0 %v512
    %845 = vmatmul.mubr.f32.gmra.mxu0 %v510
    %v846 = vpop.f32.mrf.mxu0
    %v847 = vadd.f32 0.0, %v846
    %v848 = vpop.f32.mrf.mxu0
    %849 = vmatprep.mubr.f32.mxu0 %v516
    %850 = vmatmul.mubr.f32.gmra.mxu0 %v514
    %v851 = vpop.f32.mrf.mxu0
    %v852 = vadd.f32 0.0, %v851
    %v853 = vpop.f32.mrf.mxu0
    %854 = vmatprep.mubr.f32.mxu0 %v522
    %855 = vmatmul.mubr.f32.gmra.mxu0 %v520
    %v856 = vpop.f32.mrf.mxu0
    %v857 = vadd.f32 0.0, %v856
    %v858 = vpop.f32.mrf.mxu0
    %859 = vmatprep.mubr.f32.mxu0 %v526
    %860 = vmatmul.mubr.f32.gmra.mxu0 %v524
    %v861 = vpop.f32.mrf.mxu0
    %v862 = vadd.f32 0.0, %v861
    %v863 = vpop.f32.mrf.mxu0
    %864 = vmatprep.mubr.f32.mxu0 %v532
    %865 = vmatmul.mubr.f32.gmra.mxu0 %v530
    %v866 = vpop.f32.mrf.mxu0
    %v867 = vadd.f32 0.0, %v866
    %v868 = vpop.f32.mrf.mxu0
    %869 = vmatprep.mubr.f32.mxu0 %v536
    %870 = vmatmul.mubr.f32.gmra.mxu0 %v534
    %v871 = vpop.f32.mrf.mxu0
    %v872 = vadd.f32 0.0, %v871
    %v873 = vpop.f32.mrf.mxu0
    %874 = vmatprep.mubr.f32.mxu0 %v542
    %875 = vmatmul.mubr.f32.gmra.mxu0 %v540
    %v876 = vpop.f32.mrf.mxu0
    %v877 = vadd.f32 0.0, %v876
    %v878 = vpop.f32.mrf.mxu0
    %879 = vmatprep.mubr.f32.mxu0 %v546
    %880 = vmatmul.mubr.f32.gmra.mxu0 %v544
    %v881 = vpop.f32.mrf.mxu0
    %v882 = vadd.f32 0.0, %v881
    %v883 = vpop.f32.mrf.mxu0
    %884 = vmatprep.mubr.f32.mxu0 %v552
    %885 = vmatmul.mubr.f32.gmra.mxu0 %v550
    %v886 = vpop.f32.mrf.mxu0
    %v887 = vadd.f32 0.0, %v886
    %v888 = vpop.f32.mrf.mxu0
    %889 = vmatprep.mubr.f32.mxu0 %v556
    %890 = vmatmul.mubr.f32.gmra.mxu0 %v554
    %v891 = vpop.f32.mrf.mxu0
    %v892 = vadd.f32 0.0, %v891
    %v893 = vpop.f32.mrf.mxu0
    %894 = vmatprep.mubr.f32.mxu0 %v562
    %895 = vmatmul.mubr.f32.gmra.mxu0 %v560
    %v896 = vpop.f32.mrf.mxu0
    %v897 = vadd.f32 0.0, %v896
    %v898 = vpop.f32.mrf.mxu0
    %899 = vmatprep.mubr.f32.mxu0 %v566
    %900 = vmatmul.mubr.f32.gmra.mxu0 %v564
    %v901 = vpop.f32.mrf.mxu0
    %v902 = vadd.f32 0.0, %v901
    %v903 = vpop.f32.mrf.mxu0
    %904 = vmatprep.mubr.f32.mxu0 %v572
    %905 = vmatmul.mubr.f32.gmra.mxu0 %v570
    %v906 = vpop.f32.mrf.mxu0
    %v907 = vadd.f32 0.0, %v906
    %v908 = vpop.f32.mrf.mxu0
    %909 = vmatprep.mubr.f32.mxu0 %v576
    %910 = vmatmul.mubr.f32.gmra.mxu0 %v574
    %v911 = vpop.f32.mrf.mxu0
    %v912 = vadd.f32 0.0, %v911
    %v913 = vpop.f32.mrf.mxu0
    %914 = vmatprep.mubr.f32.mxu0 %v582
    %915 = vmatmul.mubr.f32.gmra.mxu0 %v580
    %v916 = vpop.f32.mrf.mxu0
    %v917 = vadd.f32 0.0, %v916
    %v918 = vpop.f32.mrf.mxu0
    %919 = vmatprep.mubr.f32.mxu0 %v586
    %920 = vmatmul.mubr.f32.gmra.mxu0 %v584
    %v921 = vpop.f32.mrf.mxu0
    %v922 = vadd.f32 0.0, %v921
    %v923 = vpop.f32.mrf.mxu0
    %924 = vmatprep.mubr.f32.mxu0 %v592
    %925 = vmatmul.mubr.f32.gmra.mxu0 %v590
    %v926 = vpop.f32.mrf.mxu0
    %v927 = vadd.f32 0.0, %v926
    %v928 = vpop.f32.mrf.mxu0
    %929 = vmatprep.mubr.f32.mxu0 %v596
    %930 = vmatmul.mubr.f32.gmra.mxu0 %v594
    %v931 = vpop.f32.mrf.mxu0
    %v932 = vadd.f32 0.0, %v931
    %v933 = vpop.f32.mrf.mxu0
    %934 = vdwg.mxu0
    %v935 = vld [vmem:[%s0] sm:$0x7]
    %v936 = vlaneseq
    %v937 = vshrl.u32 %v936, 7
    %v938 = vlaneseq
    %v939 = vshrl.u32 %v938, 7
    %v940 = vsub.s32 0, %v939
    %v941 = vrot.slane %v935, %v940
    %v942 = vlaneseq
    %v943 = vshrl.u32 %v942, 7
    %v944 = vsub.s32 1, %v943
    %v945 = vrot.slane %v935, %v944
    %v946 = vlaneseq
    %v947 = vshrl.u32 %v946, 7
    %v948 = vsub.s32 2, %v947
    %v949 = vrot.slane %v935, %v948
    %vm950 = vcmp.eq.s32.totalorder %v937, %v941
    %vm951 = vcmp.eq.s32.totalorder %v937, %v945
    %vm952 = vcmp.eq.s32.totalorder %v937, %v949
    %v953 = vsel %vm950, 1, 0
    %v954 = vsel %vm951, 1, 0
    %v955 = vsel %vm952, 1, 0
    %v956 = vcvt.s32.f32 %v953
    %v957 = vcvt.s32.f32 %v954
    %v958 = vcvt.s32.f32 %v955
    %959 = vxpose.xlu0.b32.start [1/16] %v956, 128
    %960 = vxpose.xlu0.b32.cont [2/16] 0.0, 128
    %961 = vxpose.xlu0.b32.cont [3/16] 0.0, 128
    %962 = vxpose.xlu0.b32.cont [4/16] 0.0, 128
    %963 = vxpose.xlu0.b32.cont [5/16] 0.0, 128
    %964 = vxpose.xlu0.b32.cont [6/16] 0.0, 128
    %965 = vxpose.xlu0.b32.cont [7/16] 0.0, 128
    %966 = vxpose.xlu0.b32.cont [8/16] 0.0, 128
    %967 = vxpose.xlu0.b32.cont [9/16] 0.0, 128
    %968 = vxpose.xlu0.b32.cont [10/16] 0.0, 128
    %969 = vxpose.xlu0.b32.cont [11/16] 0.0, 128
    %970 = vxpose.xlu0.b32.cont [12/16] 0.0, 128
    %971 = vxpose.xlu0.b32.cont [13/16] 0.0, 128
    %972 = vxpose.xlu0.b32.cont [14/16] 0.0, 128
    %973 = vxpose.xlu0.b32.cont [15/16] 0.0, 128
    %974 = vxpose.xlu0.b32.end [16/16] 0.0, 128
    %v975 = vpop.trf.xlu0
    %v976 = vpop.trf.xlu0
    %v977 = vpop.trf.xlu0
    %v978 = vpop.trf.xlu0
    %v979 = vpop.trf.xlu0
    %v980 = vpop.trf.xlu0
    %v981 = vpop.trf.xlu0
    %v982 = vpop.trf.xlu0
    %v983 = vpop.trf.xlu0
    %v984 = vpop.trf.xlu0
    %v985 = vpop.trf.xlu0
    %v986 = vpop.trf.xlu0
    %v987 = vpop.trf.xlu0
    %v988 = vpop.trf.xlu0
    %v989 = vpop.trf.xlu0
    %v990 = vpop.trf.xlu0
    %991 = vxpose.xlu0.b32.start [1/16] %v957, 128
    %992 = vxpose.xlu0.b32.cont [2/16] 0.0, 128
    %993 = vxpose.xlu0.b32.cont [3/16] 0.0, 128
    %994 = vxpose.xlu0.b32.cont [4/16] 0.0, 128
    %995 = vxpose.xlu0.b32.cont [5/16] 0.0, 128
    %996 = vxpose.xlu0.b32.cont [6/16] 0.0, 128
    %997 = vxpose.xlu0.b32.cont [7/16] 0.0, 128
    %998 = vxpose.xlu0.b32.cont [8/16] 0.0, 128
    %999 = vxpose.xlu0.b32.cont [9/16] 0.0, 128
    %1000 = vxpose.xlu0.b32.cont [10/16] 0.0, 128
    %1001 = vxpose.xlu0.b32.cont [11/16] 0.0, 128
    %1002 = vxpose.xlu0.b32.cont [12/16] 0.0, 128
    %1003 = vxpose.xlu0.b32.cont [13/16] 0.0, 128
    %1004 = vxpose.xlu0.b32.cont [14/16] 0.0, 128
    %1005 = vxpose.xlu0.b32.cont [15/16] 0.0, 128
    %1006 = vxpose.xlu0.b32.end [16/16] 0.0, 128
    %v1007 = vpop.trf.xlu0
    %v1008 = vpop.trf.xlu0
    %v1009 = vpop.trf.xlu0
    %v1010 = vpop.trf.xlu0
    %v1011 = vpop.trf.xlu0
    %v1012 = vpop.trf.xlu0
    %v1013 = vpop.trf.xlu0
    %v1014 = vpop.trf.xlu0
    %v1015 = vpop.trf.xlu0
    %v1016 = vpop.trf.xlu0
    %v1017 = vpop.trf.xlu0
    %v1018 = vpop.trf.xlu0
    %v1019 = vpop.trf.xlu0
    %v1020 = vpop.trf.xlu0
    %v1021 = vpop.trf.xlu0
    %v1022 = vpop.trf.xlu0
    %1023 = vxpose.xlu0.b32.start [1/16] %v958, 128
    %1024 = vxpose.xlu0.b32.cont [2/16] 0.0, 128
    %1025 = vxpose.xlu0.b32.cont [3/16] 0.0, 128
    %1026 = vxpose.xlu0.b32.cont [4/16] 0.0, 128
    %1027 = vxpose.xlu0.b32.cont [5/16] 0.0, 128
    %1028 = vxpose.xlu0.b32.cont [6/16] 0.0, 128
    %1029 = vxpose.xlu0.b32.cont [7/16] 0.0, 128
    %1030 = vxpose.xlu0.b32.cont [8/16] 0.0, 128
    %1031 = vxpose.xlu0.b32.cont [9/16] 0.0, 128
    %1032 = vxpose.xlu0.b32.cont [10/16] 0.0, 128
    %1033 = vxpose.xlu0.b32.cont [11/16] 0.0, 128
    %1034 = vxpose.xlu0.b32.cont [12/16] 0.0, 128
    %1035 = vxpose.xlu0.b32.cont [13/16] 0.0, 128
    %1036 = vxpose.xlu0.b32.cont [14/16] 0.0, 128
    %1037 = vxpose.xlu0.b32.cont [15/16] 0.0, 128
    %1038 = vxpose.xlu0.b32.end [16/16] 0.0, 128
    %v1039 = vpop.trf.xlu0
    %v1040 = vpop.trf.xlu0
    %v1041 = vpop.trf.xlu0
    %v1042 = vpop.trf.xlu0
    %v1043 = vpop.trf.xlu0
    %v1044 = vpop.trf.xlu0
    %v1045 = vpop.trf.xlu0
    %v1046 = vpop.trf.xlu0
    %v1047 = vpop.trf.xlu0
    %v1048 = vpop.trf.xlu0
    %v1049 = vpop.trf.xlu0
    %v1050 = vpop.trf.xlu0
    %v1051 = vpop.trf.xlu0
    %v1052 = vpop.trf.xlu0
    %v1053 = vpop.trf.xlu0
    %v1054 = vpop.trf.xlu0
    %v1055 = vcombine.low %v953, %v954
    %v1057 = vunpack.c.l.s4 1966171168
    %v1058 = vunpack.c.0.s8 %v1057
    %v1059 = vlaneseq
    %v1060 = vshrl.u32 %v1059, 7
    %v1061 = vsub.s32 %v1058, %v1060
    %v1062 = vrot.slane %v1055, %v1061
    %v1064 = vunpack.c.l.s4 1966171168
    %v1065 = vunpack.c.0.s8 %v1064
    %v1066 = vlaneseq
    %v1067 = vshrl.u32 %v1066, 7
    %v1068 = vsub.s32 %v1065, %v1067
    %v1069 = vrot.slane %v955, %v1068
    %v1070 = vcombine.low %v1062, %v1069
    %v1071 = vcombine.high %v1062, %v1069
    %v1073 = vunpack.c.l.s4 1966171168
    %v1074 = vunpack.c.0.s8 %v1073
    %v1075 = vlaneseq
    %v1076 = vshrl.u32 %v1075, 7
    %v1077 = vsub.s32 %v1074, %v1076
    %v1078 = vrot.slane %v1070, %v1077
    %v1080 = vunpack.c.l.s4 1966171168
    %v1081 = vunpack.c.0.s8 %v1080
    %v1082 = vlaneseq
    %v1083 = vshrl.u32 %v1082, 7
    %v1084 = vsub.s32 %v1081, %v1083
    %v1085 = vrot.slane %v1071, %v1084
    %v1086 = vcombine.high %v1078, %v1078
    %vm1087 = vcmp.ne.s32.totalorder %v1078, 0
    %vm1088 = vcmp.ne.s32.totalorder %v1085, 0
    %vm1089 = vcmp.ne.s32.totalorder %v1086, 0
    %1090 = vxpose.xlu0.b32.start [1/16] %v697, 128
    %1091 = vxpose.xlu0.b32.cont [2/16] %v702, 128
    %1092 = vxpose.xlu0.b32.cont [3/16] %v707, 128
    %1093 = vxpose.xlu0.b32.cont [4/16] %v712, 128
    %1094 = vxpose.xlu0.b32.cont [5/16] %v717, 128
    %1095 = vxpose.xlu0.b32.cont [6/16] %v722, 128
    %1096 = vxpose.xlu0.b32.cont [7/16] %v727, 128
    %1097 = vxpose.xlu0.b32.cont [8/16] %v732, 128
    %1098 = vxpose.xlu0.b32.cont [9/16] %v737, 128
    %1099 = vxpose.xlu0.b32.cont [10/16] %v742, 128
    %1100 = vxpose.xlu0.b32.cont [11/16] %v747, 128
    %1101 = vxpose.xlu0.b32.cont [12/16] %v752, 128
    %1102 = vxpose.xlu0.b32.cont [13/16] %v757, 128
    %1103 = vxpose.xlu0.b32.cont [14/16] %v762, 128
    %1104 = vxpose.xlu0.b32.cont [15/16] %v767, 128
    %1105 = vxpose.xlu0.b32.end [16/16] %v772, 128
    %v1106 = vpop.trf.xlu0
    %v1107 = vpop.trf.xlu0
    %v1108 = vpop.trf.xlu0
    %v1109 = vpop.trf.xlu0
    %v1110 = vpop.trf.xlu0
    %v1111 = vpop.trf.xlu0
    %v1112 = vpop.trf.xlu0
    %v1113 = vpop.trf.xlu0
    %v1114 = vpop.trf.xlu0
    %v1115 = vpop.trf.xlu0
    %v1116 = vpop.trf.xlu0
    %v1117 = vpop.trf.xlu0
    %v1118 = vpop.trf.xlu0
    %v1119 = vpop.trf.xlu0
    %v1120 = vpop.trf.xlu0
    %v1121 = vpop.trf.xlu0
    %1122 = vxpose.xlu0.b32.start [1/16] %v777, 128
    %1123 = vxpose.xlu0.b32.cont [2/16] %v782, 128
    %1124 = vxpose.xlu0.b32.cont [3/16] %v787, 128
    %1125 = vxpose.xlu0.b32.cont [4/16] %v792, 128
    %1126 = vxpose.xlu0.b32.cont [5/16] %v797, 128
    %1127 = vxpose.xlu0.b32.cont [6/16] %v802, 128
    %1128 = vxpose.xlu0.b32.cont [7/16] %v807, 128
    %1129 = vxpose.xlu0.b32.cont [8/16] %v812, 128
    %1130 = vxpose.xlu0.b32.cont [9/16] %v817, 128
    %1131 = vxpose.xlu0.b32.cont [10/16] %v822, 128
    %1132 = vxpose.xlu0.b32.cont [11/16] %v827, 128
    %1133 = vxpose.xlu0.b32.cont [12/16] %v832, 128
    %1134 = vxpose.xlu0.b32.cont [13/16] %v837, 128
    %1135 = vxpose.xlu0.b32.cont [14/16] %v842, 128
    %1136 = vxpose.xlu0.b32.cont [15/16] %v847, 128
    %1137 = vxpose.xlu0.b32.end [16/16] %v852, 128
    %v1138 = vpop.trf.xlu0
    %v1139 = vpop.trf.xlu0
    %v1140 = vpop.trf.xlu0
    %v1141 = vpop.trf.xlu0
    %v1142 = vpop.trf.xlu0
    %v1143 = vpop.trf.xlu0
    %v1144 = vpop.trf.xlu0
    %v1145 = vpop.trf.xlu0
    %v1146 = vpop.trf.xlu0
    %v1147 = vpop.trf.xlu0
    %v1148 = vpop.trf.xlu0
    %v1149 = vpop.trf.xlu0
    %v1150 = vpop.trf.xlu0
    %v1151 = vpop.trf.xlu0
    %v1152 = vpop.trf.xlu0
    %v1153 = vpop.trf.xlu0
    %1154 = vxpose.xlu0.b32.start [1/16] %v857, 128
    %1155 = vxpose.xlu0.b32.cont [2/16] %v862, 128
    %1156 = vxpose.xlu0.b32.cont [3/16] %v867, 128
    %1157 = vxpose.xlu0.b32.cont [4/16] %v872, 128
    %1158 = vxpose.xlu0.b32.cont [5/16] %v877, 128
    %1159 = vxpose.xlu0.b32.cont [6/16] %v882, 128
    %1160 = vxpose.xlu0.b32.cont [7/16] %v887, 128
    %1161 = vxpose.xlu0.b32.cont [8/16] %v892, 128
    %1162 = vxpose.xlu0.b32.cont [9/16] %v897, 128
    %1163 = vxpose.xlu0.b32.cont [10/16] %v902, 128
    %1164 = vxpose.xlu0.b32.cont [11/16] %v907, 128
    %1165 = vxpose.xlu0.b32.cont [12/16] %v912, 128
    %1166 = vxpose.xlu0.b32.cont [13/16] %v917, 128
    %1167 = vxpose.xlu0.b32.cont [14/16] %v922, 128
    %1168 = vxpose.xlu0.b32.cont [15/16] %v927, 128
    %1169 = vxpose.xlu0.b32.end [16/16] %v932, 128
    %v1170 = vpop.trf.xlu0
    %v1171 = vpop.trf.xlu0
    %v1172 = vpop.trf.xlu0
    %v1173 = vpop.trf.xlu0
    %v1174 = vpop.trf.xlu0
    %v1175 = vpop.trf.xlu0
    %v1176 = vpop.trf.xlu0
    %v1177 = vpop.trf.xlu0
    %v1178 = vpop.trf.xlu0
    %v1179 = vpop.trf.xlu0
    %v1180 = vpop.trf.xlu0
    %v1181 = vpop.trf.xlu0
    %v1182 = vpop.trf.xlu0
    %v1183 = vpop.trf.xlu0
    %v1184 = vpop.trf.xlu0
    %v1185 = vpop.trf.xlu0
    %v1186 = vsel %vm1087, 1, 0
    %v1187 = vsel %vm1088, 1, 0
    %v1188 = vsel %vm1089, 1, 0
    %v1189 = vlaneseq
    %v1190 = vshrl.u32 %v1189, 7
    %v1191 = vsub.s32 0, %v1190
    %v1192 = vrot.slane %v1186, %v1191
    %v1193 = vlaneseq
    %v1194 = vshrl.u32 %v1193, 7
    %v1195 = vsub.s32 1, %v1194
    %v1196 = vrot.slane %v1186, %v1195
    %v1197 = vlaneseq
    %v1198 = vshrl.u32 %v1197, 7
    %v1199 = vsub.s32 2, %v1198
    %v1200 = vrot.slane %v1186, %v1199
    %v1201 = vlaneseq
    %v1202 = vshrl.u32 %v1201, 7
    %v1203 = vsub.s32 0, %v1202
    %v1204 = vrot.slane %v1187, %v1203
    %v1205 = vlaneseq
    %v1206 = vshrl.u32 %v1205, 7
    %v1207 = vsub.s32 1, %v1206
    %v1208 = vrot.slane %v1187, %v1207
    %v1209 = vlaneseq
    %v1210 = vshrl.u32 %v1209, 7
    %v1211 = vsub.s32 2, %v1210
    %v1212 = vrot.slane %v1187, %v1211
    %v1213 = vlaneseq
    %v1214 = vshrl.u32 %v1213, 7
    %v1215 = vsub.s32 0, %v1214
    %v1216 = vrot.slane %v1188, %v1215
    %v1217 = vlaneseq
    %v1218 = vshrl.u32 %v1217, 7
    %v1219 = vsub.s32 1, %v1218
    %v1220 = vrot.slane %v1188, %v1219
    %v1221 = vlaneseq
    %v1222 = vshrl.u32 %v1221, 7
    %v1223 = vsub.s32 2, %v1222
    %v1224 = vrot.slane %v1188, %v1223
    %vm1225 = vcmp.eq.s32.totalorder %v1192, 1
    %vm1226 = vcmp.eq.s32.totalorder %v1196, 1
    %vm1227 = vcmp.eq.s32.totalorder %v1200, 1
    %vm1228 = vcmp.eq.s32.totalorder %v1204, 1
    %vm1229 = vcmp.eq.s32.totalorder %v1208, 1
    %vm1230 = vcmp.eq.s32.totalorder %v1212, 1
    %vm1231 = vcmp.eq.s32.totalorder %v1216, 1
    %vm1232 = vcmp.eq.s32.totalorder %v1220, 1
    %vm1233 = vcmp.eq.s32.totalorder %v1224, 1
    %v1234 = vsel %vm1225, %v1106, -1e+30
    %v1235 = vsel %vm1226, %v1138, -1e+30
    %v1236 = vsel %vm1227, %v1170, -1e+30
    %v1237 = vsel %vm1228, %v1106, -1e+30
    %v1238 = vsel %vm1229, %v1138, -1e+30
    %v1239 = vsel %vm1230, %v1170, -1e+30
    %v1240 = vsel %vm1231, %v1106, -1e+30
    %v1241 = vsel %vm1232, %v1138, -1e+30
    %v1242 = vsel %vm1233, %v1170, -1e+30
    %vm1243 = vcmask 1043456
    %v1244 = vsel %vm1243, %v1234, -inf
    %v1245 = vsel %vm1243, %v1235, -inf
    %v1246 = vsel %vm1243, %v1236, -inf
    %v1247 = vmax.f32 %v1244, %v1246
    %v1248 = vmax.f32 %v1247, %v1245
    %1249 = vmax.xlane.f32.xlu0 %v1248
    %v1250 = vpop.xlane.xlu0 %1249
    %v1251 = vsel %vm1243, %v1237, -inf
    %v1252 = vsel %vm1243, %v1238, -inf
    %v1253 = vsel %vm1243, %v1239, -inf
    %v1254 = vmax.f32 %v1251, %v1253
    %v1255 = vmax.f32 %v1254, %v1252
    %1256 = vmax.xlane.f32.xlu0 %v1255
    %v1257 = vpop.xlane.xlu0 %1256
    %v1258 = vsel %vm1243, %v1240, -inf
    %v1259 = vsel %vm1243, %v1241, -inf
    %v1260 = vsel %vm1243, %v1242, -inf
    %v1261 = vmax.f32 %v1258, %v1260
    %v1262 = vmax.f32 %v1261, %v1259
    %1263 = vmax.xlane.f32.xlu0 %v1262
    %v1264 = vpop.xlane.xlu0 %1263
    %v1265 = vld [vmem:[#allocation2] sm:$0x7]
    %v1269 = vlaneseq
    %v1270 = vand.u32 %v1269, 127
    %v1271 = vlaneseq
    %v1272 = vshrl.u32 %v1271, 7
    %v1273 = vsub.s32 %v1270, %v1272
    %v1274 = vrot.slane %v1250, %v1273
    %v1275 = vlaneseq
    %v1276 = vshrl.u32 %v1275, 7
    %v1277 = vsub.s32 %v1270, %v1276
    %v1278 = vrot.slane %v1257, %v1277
    %v1279 = vlaneseq
    %v1280 = vshrl.u32 %v1279, 7
    %v1281 = vsub.s32 %v1270, %v1280
    %v1282 = vrot.slane %v1264, %v1281
    %vm1283 = vcmask 1041409
    %v1284 = vsel %vm1283, %v1278, %v1274
    %vm1285 = vcmask 1042434
    %v1286 = vsel %vm1285, %v1282, %v1284
    %v1288 = vmax.f32 %v1265, %v1286
    %v1289 = vsub.f32 %v1265, %v1288
    %v1290 = vmul.f32 %v1289, 1.442695
    %v1291 = vpow.pop %v1290
    %vm1292 = vcmask 23552
    %v1294 = vsel %vm1292, %v975, 0
    %v1297 = vsel %vm1292, %v976, 0
    %v1300 = vsel %vm1292, %v977, 0
    %v1303 = vsel %vm1292, %v978, 0
    %v1306 = vsel %vm1292, %v979, 0
    %v1309 = vsel %vm1292, %v980, 0
    %v1312 = vsel %vm1292, %v981, 0
    %v1315 = vsel %vm1292, %v982, 0
    %v1318 = vsel %vm1292, %v983, 0
    %v1321 = vsel %vm1292, %v984, 0
    %v1324 = vsel %vm1292, %v985, 0
    %v1327 = vsel %vm1292, %v986, 0
    %v1330 = vsel %vm1292, %v987, 0
    %v1333 = vsel %vm1292, %v988, 0
    %v1336 = vsel %vm1292, %v989, 0
    %v1339 = vsel %vm1292, %v990, 0
    %v1342 = vsel %vm1292, %v1007, 0
    %v1345 = vsel %vm1292, %v1008, 0
    %v1348 = vsel %vm1292, %v1009, 0
    %v1351 = vsel %vm1292, %v1010, 0
    %v1354 = vsel %vm1292, %v1011, 0
    %v1357 = vsel %vm1292, %v1012, 0
    %v1360 = vsel %vm1292, %v1013, 0
    %v1363 = vsel %vm1292, %v1014, 0
    %v1366 = vsel %vm1292, %v1015, 0
    %v1369 = vsel %vm1292, %v1016, 0
    %v1372 = vsel %vm1292, %v1017, 0
    %v1375 = vsel %vm1292, %v1018, 0
    %v1378 = vsel %vm1292, %v1019, 0
    %v1381 = vsel %vm1292, %v1020, 0
    %v1384 = vsel %vm1292, %v1021, 0
    %v1387 = vsel %vm1292, %v1022, 0
    %v1390 = vsel %vm1292, %v1039, 0
    %v1393 = vsel %vm1292, %v1040, 0
    %v1396 = vsel %vm1292, %v1041, 0
    %v1399 = vsel %vm1292, %v1042, 0
    %v1402 = vsel %vm1292, %v1043, 0
    %v1405 = vsel %vm1292, %v1044, 0
    %v1408 = vsel %vm1292, %v1045, 0
    %v1411 = vsel %vm1292, %v1046, 0
    %v1414 = vsel %vm1292, %v1047, 0
    %v1417 = vsel %vm1292, %v1048, 0
    %v1420 = vsel %vm1292, %v1049, 0
    %v1423 = vsel %vm1292, %v1050, 0
    %v1426 = vsel %vm1292, %v1051, 0
    %v1429 = vsel %vm1292, %v1052, 0
    %v1432 = vsel %vm1292, %v1053, 0
    %v1435 = vsel %vm1292, %v1054, 0
    %vm1437 = vcmask 1042432
    %v1439 = vsel %vm1437, %v1288, 0
    %1441 = vmatprep.subr.mxu0 0.0
    %1442 = vmatpush1.msra.mxu0 0.0
    %1443 = vmatprep.subr.mxu0 0.0
    %1444 = vmatpush1.msra.mxu0 0.0
    %1445 = vmatprep.subr.mxu0 0.0
    %1446 = vmatpush1.msra.mxu0 0.0
    %1447 = vmatprep.subr.mxu0 0.0
    %1448 = vmatpush1.msra.mxu0 0.0
    %1449 = vmatprep.subr.mxu0 0.0
    %1450 = vmatpush1.msra.mxu0 0.0
    %1451 = vmatprep.subr.mxu0 0.0
    %1452 = vmatpush1.msra.mxu0 0.0
    %1453 = vmatprep.subr.mxu0 0.0
    %1454 = vmatpush1.msra.mxu0 0.0
    %1455 = vmatprep.subr.mxu0 0.0
    %1456 = vmatpush1.msra.mxu0 0.0
    %1457 = vmatprep.subr.mxu0 0.0
    %1458 = vmatpush1.msra.mxu0 0.0
    %1459 = vmatprep.subr.mxu0 0.0
    %1460 = vmatpush1.msra.mxu0 0.0
    %1461 = vmatprep.subr.mxu0 0.0
    %1462 = vmatpush1.msra.mxu0 0.0
    %1463 = vmatprep.subr.mxu0 0.0
    %1464 = vmatpush1.msra.mxu0 0.0
    %1465 = vmatprep.subr.mxu0 0.0
    %1466 = vmatpush1.msra.mxu0 0.0
    %1467 = vmatprep.subr.mxu0 0.0
    %1468 = vmatpush1.msra.mxu0 0.0
    %1469 = vmatprep.subr.mxu0 0.0
    %1470 = vmatpush1.msra.mxu0 0.0
    %1471 = vmatprep.subr.mxu0 0.0
    %1472 = vmatpush1.msra.mxu0 %v1439
    %1473 = vmatprep.subr.mxu0 0.0
    %1474 = vmatpush2.msra.mxu0 0.0
    %1475 = vmatprep.subr.mxu0 0.0
    %1476 = vmatpush2.msra.mxu0 0.0
    %1477 = vmatprep.subr.mxu0 0.0
    %1478 = vmatpush2.msra.mxu0 0.0
    %1479 = vmatprep.subr.mxu0 0.0
    %1480 = vmatpush2.msra.mxu0 0.0
    %1481 = vmatprep.subr.mxu0 0.0
    %1482 = vmatpush2.msra.mxu0 0.0
    %1483 = vmatprep.subr.mxu0 0.0
    %1484 = vmatpush2.msra.mxu0 0.0
    %1485 = vmatprep.subr.mxu0 0.0
    %1486 = vmatpush2.msra.mxu0 0.0
    %1487 = vmatprep.subr.mxu0 0.0
    %1488 = vmatpush2.msra.mxu0 0.0
    %1489 = vmatprep.subr.mxu0 0.0
    %1490 = vmatpush2.msra.mxu0 0.0
    %1491 = vmatprep.subr.mxu0 0.0
    %1492 = vmatpush2.msra.mxu0 0.0
    %1493 = vmatprep.subr.mxu0 0.0
    %1494 = vmatpush2.msra.mxu0 0.0
    %1495 = vmatprep.subr.mxu0 0.0
    %1496 = vmatpush2.msra.mxu0 0.0
    %1497 = vmatprep.subr.mxu0 0.0
    %1498 = vmatpush2.msra.mxu0 0.0
    %1499 = vmatprep.subr.mxu0 0.0
    %1500 = vmatpush2.msra.mxu0 0.0
    %1501 = vmatprep.subr.mxu0 0.0
    %1502 = vmatpush2.msra.mxu0 0.0
    %1503 = vmatprep.subr.mxu0 0.0
    %1504 = vmatpush2.msra.mxu0 0.0
    %1505 = vmatprep.mubr.f32.mxu0 0.0
    %1506 = vmatmul.mubr.f32.gmra.mxu0 %v1294
    %v1507 = vpop.f32.mrf.mxu0
    %v1508 = vadd.f32 0.0, %v1507
    %v1509 = vpop.f32.mrf.mxu0
    %1510 = vmatprep.mubr.f32.mxu0 0.0
    %1511 = vmatmul.mubr.f32.gmra.mxu0 %v1297
    %v1512 = vpop.f32.mrf.mxu0
    %v1513 = vadd.f32 0.0, %v1512
    %v1514 = vpop.f32.mrf.mxu0
    %1515 = vmatprep.mubr.f32.mxu0 0.0
    %1516 = vmatmul.mubr.f32.gmra.mxu0 %v1300
    %v1517 = vpop.f32.mrf.mxu0
    %v1518 = vadd.f32 0.0, %v1517
    %v1519 = vpop.f32.mrf.mxu0
    %1520 = vmatprep.mubr.f32.mxu0 0.0
    %1521 = vmatmul.mubr.f32.gmra.mxu0 %v1303
    %v1522 = vpop.f32.mrf.mxu0
    %v1523 = vadd.f32 0.0, %v1522
    %v1524 = vpop.f32.mrf.mxu0
    %1525 = vmatprep.mubr.f32.mxu0 0.0
    %1526 = vmatmul.mubr.f32.gmra.mxu0 %v1306
    %v1527 = vpop.f32.mrf.mxu0
    %v1528 = vadd.f32 0.0, %v1527
    %v1529 = vpop.f32.mrf.mxu0
    %1530 = vmatprep.mubr.f32.mxu0 0.0
    %1531 = vmatmul.mubr.f32.gmra.mxu0 %v1309
    %v1532 = vpop.f32.mrf.mxu0
    %v1533 = vadd.f32 0.0, %v1532
    %v1534 = vpop.f32.mrf.mxu0
    %1535 = vmatprep.mubr.f32.mxu0 0.0
    %1536 = vmatmul.mubr.f32.gmra.mxu0 %v1312
    %v1537 = vpop.f32.mrf.mxu0
    %v1538 = vadd.f32 0.0, %v1537
    %v1539 = vpop.f32.mrf.mxu0
    %1540 = vmatprep.mubr.f32.mxu0 0.0
    %1541 = vmatmul.mubr.f32.gmra.mxu0 %v1315
    %v1542 = vpop.f32.mrf.mxu0
    %v1543 = vadd.f32 0.0, %v1542
    %v1544 = vpop.f32.mrf.mxu0
    %1545 = vmatprep.mubr.f32.mxu0 0.0
    %1546 = vmatmul.mubr.f32.gmra.mxu0 %v1318
    %v1547 = vpop.f32.mrf.mxu0
    %v1548 = vadd.f32 0.0, %v1547
    %v1549 = vpop.f32.mrf.mxu0
    %1550 = vmatprep.mubr.f32.mxu0 0.0
    %1551 = vmatmul.mubr.f32.gmra.mxu0 %v1321
    %v1552 = vpop.f32.mrf.mxu0
    %v1553 = vadd.f32 0.0, %v1552
    %v1554 = vpop.f32.mrf.mxu0
    %1555 = vmatprep.mubr.f32.mxu0 0.0
    %1556 = vmatmul.mubr.f32.gmra.mxu0 %v1324
    %v1557 = vpop.f32.mrf.mxu0
    %v1558 = vadd.f32 0.0, %v1557
    %v1559 = vpop.f32.mrf.mxu0
    %1560 = vmatprep.mubr.f32.mxu0 0.0
    %1561 = vmatmul.mubr.f32.gmra.mxu0 %v1327
    %v1562 = vpop.f32.mrf.mxu0
    %v1563 = vadd.f32 0.0, %v1562
    %v1564 = vpop.f32.mrf.mxu0
    %1565 = vmatprep.mubr.f32.mxu0 0.0
    %1566 = vmatmul.mubr.f32.gmra.mxu0 %v1330
    %v1567 = vpop.f32.mrf.mxu0
    %v1568 = vadd.f32 0.0, %v1567
    %v1569 = vpop.f32.mrf.mxu0
    %1570 = vmatprep.mubr.f32.mxu0 0.0
    %1571 = vmatmul.mubr.f32.gmra.mxu0 %v1333
    %v1572 = vpop.f32.mrf.mxu0
    %v1573 = vadd.f32 0.0, %v1572
    %v1574 = vpop.f32.mrf.mxu0
    %1575 = vmatprep.mubr.f32.mxu0 0.0
    %1576 = vmatmul.mubr.f32.gmra.mxu0 %v1336
    %v1577 = vpop.f32.mrf.mxu0
    %v1578 = vadd.f32 0.0, %v1577
    %v1579 = vpop.f32.mrf.mxu0
    %1580 = vmatprep.mubr.f32.mxu0 0.0
    %1581 = vmatmul.mubr.f32.gmra.mxu0 %v1339
    %v1582 = vpop.f32.mrf.mxu0
    %v1583 = vadd.f32 0.0, %v1582
    %v1584 = vpop.f32.mrf.mxu0
    %1585 = vmatprep.mubr.f32.mxu0 0.0
    %1586 = vmatmul.mubr.f32.gmra.mxu0 %v1342
    %v1587 = vpop.f32.mrf.mxu0
    %v1588 = vadd.f32 0.0, %v1587
    %v1589 = vpop.f32.mrf.mxu0
    %1590 = vmatprep.mubr.f32.mxu0 0.0
    %1591 = vmatmul.mubr.f32.gmra.mxu0 %v1345
    %v1592 = vpop.f32.mrf.mxu0
    %v1593 = vadd.f32 0.0, %v1592
    %v1594 = vpop.f32.mrf.mxu0
    %1595 = vmatprep.mubr.f32.mxu0 0.0
    %1596 = vmatmul.mubr.f32.gmra.mxu0 %v1348
    %v1597 = vpop.f32.mrf.mxu0
    %v1598 = vadd.f32 0.0, %v1597
    %v1599 = vpop.f32.mrf.mxu0
    %1600 = vmatprep.mubr.f32.mxu0 0.0
    %1601 = vmatmul.mubr.f32.gmra.mxu0 %v1351
    %v1602 = vpop.f32.mrf.mxu0
    %v1603 = vadd.f32 0.0, %v1602
    %v1604 = vpop.f32.mrf.mxu0
    %1605 = vmatprep.mubr.f32.mxu0 0.0
    %1606 = vmatmul.mubr.f32.gmra.mxu0 %v1354
    %v1607 = vpop.f32.mrf.mxu0
    %v1608 = vadd.f32 0.0, %v1607
    %v1609 = vpop.f32.mrf.mxu0
    %1610 = vmatprep.mubr.f32.mxu0 0.0
    %1611 = vmatmul.mubr.f32.gmra.mxu0 %v1357
    %v1612 = vpop.f32.mrf.mxu0
    %v1613 = vadd.f32 0.0, %v1612
    %v1614 = vpop.f32.mrf.mxu0
    %1615 = vmatprep.mubr.f32.mxu0 0.0
    %1616 = vmatmul.mubr.f32.gmra.mxu0 %v1360
    %v1617 = vpop.f32.mrf.mxu0
    %v1618 = vadd.f32 0.0, %v1617
    %v1619 = vpop.f32.mrf.mxu0
    %1620 = vmatprep.mubr.f32.mxu0 0.0
    %1621 = vmatmul.mubr.f32.gmra.mxu0 %v1363
    %v1622 = vpop.f32.mrf.mxu0
    %v1623 = vadd.f32 0.0, %v1622
    %v1624 = vpop.f32.mrf.mxu0
    %1625 = vmatprep.mubr.f32.mxu0 0.0
    %1626 = vmatmul.mubr.f32.gmra.mxu0 %v1366
    %v1627 = vpop.f32.mrf.mxu0
    %v1628 = vadd.f32 0.0, %v1627
    %v1629 = vpop.f32.mrf.mxu0
    %1630 = vmatprep.mubr.f32.mxu0 0.0
    %1631 = vmatmul.mubr.f32.gmra.mxu0 %v1369
    %v1632 = vpop.f32.mrf.mxu0
    %v1633 = vadd.f32 0.0, %v1632
    %v1634 = vpop.f32.mrf.mxu0
    %1635 = vmatprep.mubr.f32.mxu0 0.0
    %1636 = vmatmul.mubr.f32.gmra.mxu0 %v1372
    %v1637 = vpop.f32.mrf.mxu0
    %v1638 = vadd.f32 0.0, %v1637
    %v1639 = vpop.f32.mrf.mxu0
    %1640 = vmatprep.mubr.f32.mxu0 0.0
    %1641 = vmatmul.mubr.f32.gmra.mxu0 %v1375
    %v1642 = vpop.f32.mrf.mxu0
    %v1643 = vadd.f32 0.0, %v1642
    %v1644 = vpop.f32.mrf.mxu0
    %1645 = vmatprep.mubr.f32.mxu0 0.0
    %1646 = vmatmul.mubr.f32.gmra.mxu0 %v1378
    %v1647 = vpop.f32.mrf.mxu0
    %v1648 = vadd.f32 0.0, %v1647
    %v1649 = vpop.f32.mrf.mxu0
    %1650 = vmatprep.mubr.f32.mxu0 0.0
    %1651 = vmatmul.mubr.f32.gmra.mxu0 %v1381
    %v1652 = vpop.f32.mrf.mxu0
    %v1653 = vadd.f32 0.0, %v1652
    %v1654 = vpop.f32.mrf.mxu0
    %1655 = vmatprep.mubr.f32.mxu0 0.0
    %1656 = vmatmul.mubr.f32.gmra.mxu0 %v1384
    %v1657 = vpop.f32.mrf.mxu0
    %v1658 = vadd.f32 0.0, %v1657
    %v1659 = vpop.f32.mrf.mxu0
    %1660 = vmatprep.mubr.f32.mxu0 0.0
    %1661 = vmatmul.mubr.f32.gmra.mxu0 %v1387
    %v1662 = vpop.f32.mrf.mxu0
    %v1663 = vadd.f32 0.0, %v1662
    %v1664 = vpop.f32.mrf.mxu0
    %1665 = vmatprep.mubr.f32.mxu0 0.0
    %1666 = vmatmul.mubr.f32.gmra.mxu0 %v1390
    %v1667 = vpop.f32.mrf.mxu0
    %v1668 = vadd.f32 0.0, %v1667
    %v1669 = vpop.f32.mrf.mxu0
    %1670 = vmatprep.mubr.f32.mxu0 0.0
    %1671 = vmatmul.mubr.f32.gmra.mxu0 %v1393
    %v1672 = vpop.f32.mrf.mxu0
    %v1673 = vadd.f32 0.0, %v1672
    %v1674 = vpop.f32.mrf.mxu0
    %1675 = vmatprep.mubr.f32.mxu0 0.0
    %1676 = vmatmul.mubr.f32.gmra.mxu0 %v1396
    %v1677 = vpop.f32.mrf.mxu0
    %v1678 = vadd.f32 0.0, %v1677
    %v1679 = vpop.f32.mrf.mxu0
    %1680 = vmatprep.mubr.f32.mxu0 0.0
    %1681 = vmatmul.mubr.f32.gmra.mxu0 %v1399
    %v1682 = vpop.f32.mrf.mxu0
    %v1683 = vadd.f32 0.0, %v1682
    %v1684 = vpop.f32.mrf.mxu0
    %1685 = vmatprep.mubr.f32.mxu0 0.0
    %1686 = vmatmul.mubr.f32.gmra.mxu0 %v1402
    %v1687 = vpop.f32.mrf.mxu0
    %v1688 = vadd.f32 0.0, %v1687
    %v1689 = vpop.f32.mrf.mxu0
    %1690 = vmatprep.mubr.f32.mxu0 0.0
    %1691 = vmatmul.mubr.f32.gmra.mxu0 %v1405
    %v1692 = vpop.f32.mrf.mxu0
    %v1693 = vadd.f32 0.0, %v1692
    %v1694 = vpop.f32.mrf.mxu0
    %1695 = vmatprep.mubr.f32.mxu0 0.0
    %1696 = vmatmul.mubr.f32.gmra.mxu0 %v1408
    %v1697 = vpop.f32.mrf.mxu0
    %v1698 = vadd.f32 0.0, %v1697
    %v1699 = vpop.f32.mrf.mxu0
    %1700 = vmatprep.mubr.f32.mxu0 0.0
    %1701 = vmatmul.mubr.f32.gmra.mxu0 %v1411
    %v1702 = vpop.f32.mrf.mxu0
    %v1703 = vadd.f32 0.0, %v1702
    %v1704 = vpop.f32.mrf.mxu0
    %1705 = vmatprep.mubr.f32.mxu0 0.0
    %1706 = vmatmul.mubr.f32.gmra.mxu0 %v1414
    %v1707 = vpop.f32.mrf.mxu0
    %v1708 = vadd.f32 0.0, %v1707
    %v1709 = vpop.f32.mrf.mxu0
    %1710 = vmatprep.mubr.f32.mxu0 0.0
    %1711 = vmatmul.mubr.f32.gmra.mxu0 %v1417
    %v1712 = vpop.f32.mrf.mxu0
    %v1713 = vadd.f32 0.0, %v1712
    %v1714 = vpop.f32.mrf.mxu0
    %1715 = vmatprep.mubr.f32.mxu0 0.0
    %1716 = vmatmul.mubr.f32.gmra.mxu0 %v1420
    %v1717 = vpop.f32.mrf.mxu0
    %v1718 = vadd.f32 0.0, %v1717
    %v1719 = vpop.f32.mrf.mxu0
    %1720 = vmatprep.mubr.f32.mxu0 0.0
    %1721 = vmatmul.mubr.f32.gmra.mxu0 %v1423
    %v1722 = vpop.f32.mrf.mxu0
    %v1723 = vadd.f32 0.0, %v1722
    %v1724 = vpop.f32.mrf.mxu0
    %1725 = vmatprep.mubr.f32.mxu0 0.0
    %1726 = vmatmul.mubr.f32.gmra.mxu0 %v1426
    %v1727 = vpop.f32.mrf.mxu0
    %v1728 = vadd.f32 0.0, %v1727
    %v1729 = vpop.f32.mrf.mxu0
    %1730 = vmatprep.mubr.f32.mxu0 0.0
    %1731 = vmatmul.mubr.f32.gmra.mxu0 %v1429
    %v1732 = vpop.f32.mrf.mxu0
    %v1733 = vadd.f32 0.0, %v1732
    %v1734 = vpop.f32.mrf.mxu0
    %1735 = vmatprep.mubr.f32.mxu0 0.0
    %1736 = vmatmul.mubr.f32.gmra.mxu0 %v1432
    %v1737 = vpop.f32.mrf.mxu0
    %v1738 = vadd.f32 0.0, %v1737
    %v1739 = vpop.f32.mrf.mxu0
    %1740 = vmatprep.mubr.f32.mxu0 0.0
    %1741 = vmatmul.mubr.f32.gmra.mxu0 %v1435
    %v1742 = vpop.f32.mrf.mxu0
    %v1743 = vadd.f32 0.0, %v1742
    %v1744 = vpop.f32.mrf.mxu0
    %1745 = vdwg.mxu0
    %v1746 = vsub.f32 %v697, %v1508
    %v1747 = vsub.f32 %v702, %v1513
    %v1748 = vsub.f32 %v707, %v1518
    %v1749 = vsub.f32 %v712, %v1523
    %v1750 = vsub.f32 %v717, %v1528
    %v1751 = vsub.f32 %v722, %v1533
    %v1752 = vsub.f32 %v727, %v1538
    %v1753 = vsub.f32 %v732, %v1543
    %v1754 = vsub.f32 %v737, %v1548
    %v1755 = vsub.f32 %v742, %v1553
    %v1756 = vsub.f32 %v747, %v1558
    %v1757 = vsub.f32 %v752, %v1563
    %v1758 = vsub.f32 %v757, %v1568
    %v1759 = vsub.f32 %v762, %v1573
    %v1760 = vsub.f32 %v767, %v1578
    %v1761 = vsub.f32 %v772, %v1583
    %v1762 = vsub.f32 %v777, %v1588
    %v1763 = vsub.f32 %v782, %v1593
    %v1764 = vsub.f32 %v787, %v1598
    %v1765 = vsub.f32 %v792, %v1603
    %v1766 = vsub.f32 %v797, %v1608
    %v1767 = vsub.f32 %v802, %v1613
    %v1768 = vsub.f32 %v807, %v1618
    %v1769 = vsub.f32 %v812, %v1623
    %v1770 = vsub.f32 %v817, %v1628
    %v1771 = vsub.f32 %v822, %v1633
    %v1772 = vsub.f32 %v827, %v1638
    %v1773 = vsub.f32 %v832, %v1643
    %v1774 = vsub.f32 %v837, %v1648
    %v1775 = vsub.f32 %v842, %v1653
    %v1776 = vsub.f32 %v847, %v1658
    %v1777 = vsub.f32 %v852, %v1663
    %v1778 = vsub.f32 %v857, %v1668
    %v1779 = vsub.f32 %v862, %v1673
    %v1780 = vsub.f32 %v867, %v1678
    %v1781 = vsub.f32 %v872, %v1683
    %v1782 = vsub.f32 %v877, %v1688
    %v1783 = vsub.f32 %v882, %v1693
    %v1784 = vsub.f32 %v887, %v1698
    %v1785 = vsub.f32 %v892, %v1703
    %v1786 = vsub.f32 %v897, %v1708
    %v1787 = vsub.f32 %v902, %v1713
    %v1788 = vsub.f32 %v907, %v1718
    %v1789 = vsub.f32 %v912, %v1723
    %v1790 = vsub.f32 %v917, %v1728
    %v1791 = vsub.f32 %v922, %v1733
    %v1792 = vsub.f32 %v927, %v1738
    %v1793 = vsub.f32 %v932, %v1743
    %v1794 = vmul.f32 %v1746, 1.442695
    %v1795 = vpow.pop %v1794
    %v1796 = vmul.f32 %v1747, 1.442695
    %v1797 = vpow.pop %v1796
    %v1798 = vmul.f32 %v1748, 1.442695
    %v1799 = vpow.pop %v1798
    %v1800 = vmul.f32 %v1749, 1.442695
    %v1801 = vpow.pop %v1800
    %v1802 = vmul.f32 %v1750, 1.442695
    %v1803 = vpow.pop %v1802
    %v1804 = vmul.f32 %v1751, 1.442695
    %v1805 = vpow.pop %v1804
    %v1806 = vmul.f32 %v1752, 1.442695
    %v1807 = vpow.pop %v1806
    %v1808 = vmul.f32 %v1753, 1.442695
    %v1809 = vpow.pop %v1808
    %v1810 = vmul.f32 %v1754, 1.442695
    %v1811 = vpow.pop %v1810
    %v1812 = vmul.f32 %v1755, 1.442695
    %v1813 = vpow.pop %v1812
    %v1814 = vmul.f32 %v1756, 1.442695
    %v1815 = vpow.pop %v1814
    %v1816 = vmul.f32 %v1757, 1.442695
    %v1817 = vpow.pop %v1816
    %v1818 = vmul.f32 %v1758, 1.442695
    %v1819 = vpow.pop %v1818
    %v1820 = vmul.f32 %v1759, 1.442695
    %v1821 = vpow.pop %v1820
    %v1822 = vmul.f32 %v1760, 1.442695
    %v1823 = vpow.pop %v1822
    %v1824 = vmul.f32 %v1761, 1.442695
    %v1825 = vpow.pop %v1824
    %v1826 = vmul.f32 %v1762, 1.442695
    %v1827 = vpow.pop %v1826
    %v1828 = vmul.f32 %v1763, 1.442695
    %v1829 = vpow.pop %v1828
    %v1830 = vmul.f32 %v1764, 1.442695
    %v1831 = vpow.pop %v1830
    %v1832 = vmul.f32 %v1765, 1.442695
    %v1833 = vpow.pop %v1832
    %v1834 = vmul.f32 %v1766, 1.442695
    %v1835 = vpow.pop %v1834
    %v1836 = vmul.f32 %v1767, 1.442695
    %v1837 = vpow.pop %v1836
    %v1838 = vmul.f32 %v1768, 1.442695
    %v1839 = vpow.pop %v1838
    %v1840 = vmul.f32 %v1769, 1.442695
    %v1841 = vpow.pop %v1840
    %v1842 = vmul.f32 %v1770, 1.442695
    %v1843 = vpow.pop %v1842
    %v1844 = vmul.f32 %v1771, 1.442695
    %v1845 = vpow.pop %v1844
    %v1846 = vmul.f32 %v1772, 1.442695
    %v1847 = vpow.pop %v1846
    %v1848 = vmul.f32 %v1773, 1.442695
    %v1849 = vpow.pop %v1848
    %v1850 = vmul.f32 %v1774, 1.442695
    %v1851 = vpow.pop %v1850
    %v1852 = vmul.f32 %v1775, 1.442695
    %v1853 = vpow.pop %v1852
    %v1854 = vmul.f32 %v1776, 1.442695
    %v1855 = vpow.pop %v1854
    %v1856 = vmul.f32 %v1777, 1.442695
    %v1857 = vpow.pop %v1856
    %v1858 = vmul.f32 %v1778, 1.442695
    %v1859 = vpow.pop %v1858
    %v1860 = vmul.f32 %v1779, 1.442695
    %v1861 = vpow.pop %v1860
    %v1862 = vmul.f32 %v1780, 1.442695
    %v1863 = vpow.pop %v1862
    %v1864 = vmul.f32 %v1781, 1.442695
    %v1865 = vpow.pop %v1864
    %v1866 = vmul.f32 %v1782, 1.442695
    %v1867 = vpow.pop %v1866
    %v1868 = vmul.f32 %v1783, 1.442695
    %v1869 = vpow.pop %v1868
    %v1870 = vmul.f32 %v1784, 1.442695
    %v1871 = vpow.pop %v1870
    %v1872 = vmul.f32 %v1785, 1.442695
    %v1873 = vpow.pop %v1872
    %v1874 = vmul.f32 %v1786, 1.442695
    %v1875 = vpow.pop %v1874
    %v1876 = vmul.f32 %v1787, 1.442695
    %v1877 = vpow.pop %v1876
    %v1878 = vmul.f32 %v1788, 1.442695
    %v1879 = vpow.pop %v1878
    %v1880 = vmul.f32 %v1789, 1.442695
    %v1881 = vpow.pop %v1880
    %v1882 = vmul.f32 %v1790, 1.442695
    %v1883 = vpow.pop %v1882
    %v1884 = vmul.f32 %v1791, 1.442695
    %v1885 = vpow.pop %v1884
    %v1886 = vmul.f32 %v1792, 1.442695
    %v1887 = vpow.pop %v1886
    %v1888 = vmul.f32 %v1793, 1.442695
    %v1889 = vpow.pop %v1888
    %v1890 = vld [vmem:[#allocation3] sm:$0x7]
    %v1891 = vmul.f32 %v1291, %v1890
    %1892 = vmatprep.subr.mxu0 0.0
    %1893 = vmatpush1.msra.mxu0 %v1825
    %1894 = vmatprep.subr.mxu0 0.0
    %1895 = vmatpush1.msra.mxu0 %v1823
    %1896 = vmatprep.subr.mxu0 0.0
    %1897 = vmatpush1.msra.mxu0 %v1821
    %1898 = vmatprep.subr.mxu0 0.0
    %1899 = vmatpush1.msra.mxu0 %v1819
    %1900 = vmatprep.subr.mxu0 0.0
    %1901 = vmatpush1.msra.mxu0 %v1817
    %1902 = vmatprep.subr.mxu0 0.0
    %1903 = vmatpush1.msra.mxu0 %v1815
    %1904 = vmatprep.subr.mxu0 0.0
    %1905 = vmatpush1.msra.mxu0 %v1813
    %1906 = vmatprep.subr.mxu0 0.0
    %1907 = vmatpush1.msra.mxu0 %v1811
    %1908 = vmatprep.subr.mxu0 0.0
    %1909 = vmatpush1.msra.mxu0 %v1809
    %1910 = vmatprep.subr.mxu0 0.0
    %1911 = vmatpush1.msra.mxu0 %v1807
    %1912 = vmatprep.subr.mxu0 0.0
    %1913 = vmatpush1.msra.mxu0 %v1805
    %1914 = vmatprep.subr.mxu0 0.0
    %1915 = vmatpush1.msra.mxu0 %v1803
    %1916 = vmatprep.subr.mxu0 0.0
    %1917 = vmatpush1.msra.mxu0 %v1801
    %1918 = vmatprep.subr.mxu0 0.0
    %1919 = vmatpush1.msra.mxu0 %v1799
    %1920 = vmatprep.subr.mxu0 0.0
    %1921 = vmatpush1.msra.mxu0 %v1797
    %1922 = vmatprep.subr.mxu0 0.0
    %1923 = vmatpush1.msra.mxu0 %v1795
    %1924 = vmatprep.subr.mxu0 0.0
    %1925 = vmatpush2.msra.mxu0 %v1857
    %1926 = vmatprep.subr.mxu0 0.0
    %1927 = vmatpush2.msra.mxu0 %v1855
    %1928 = vmatprep.subr.mxu0 0.0
    %1929 = vmatpush2.msra.mxu0 %v1853
    %1930 = vmatprep.subr.mxu0 0.0
    %1931 = vmatpush2.msra.mxu0 %v1851
    %1932 = vmatprep.subr.mxu0 0.0
    %1933 = vmatpush2.msra.mxu0 %v1849
    %1934 = vmatprep.subr.mxu0 0.0
    %1935 = vmatpush2.msra.mxu0 %v1847
    %1936 = vmatprep.subr.mxu0 0.0
    %1937 = vmatpush2.msra.mxu0 %v1845
    %1938 = vmatprep.subr.mxu0 0.0
    %1939 = vmatpush2.msra.mxu0 %v1843
    %1940 = vmatprep.subr.mxu0 0.0
    %1941 = vmatpush2.msra.mxu0 %v1841
    %1942 = vmatprep.subr.mxu0 0.0
    %1943 = vmatpush2.msra.mxu0 %v1839
    %1944 = vmatprep.subr.mxu0 0.0
    %1945 = vmatpush2.msra.mxu0 %v1837
    %1946 = vmatprep.subr.mxu0 0.0
    %1947 = vmatpush2.msra.mxu0 %v1835
    %1948 = vmatprep.subr.mxu0 0.0
    %1949 = vmatpush2.msra.mxu0 %v1833
    %1950 = vmatprep.subr.mxu0 0.0
    %1951 = vmatpush2.msra.mxu0 %v1831
    %1952 = vmatprep.subr.mxu0 0.0
    %1953 = vmatpush2.msra.mxu0 %v1829
    %1954 = vmatprep.subr.mxu0 0.0
    %1955 = vmatpush2.msra.mxu0 %v1827
    %1956 = vmatprep.mubr.f32.mxu0 %v957
    %1957 = vmatmul.mubr.f32.gmra.mxu0 %v956
    %v1958 = vpop.f32.mrf.mxu0
    %v1959 = vadd.f32 0.0, %v1958
    %v1960 = vpop.f32.mrf.mxu0
    %1961 = vdwg.mxu0
    %1962 = vmatprep.subr.mxu0 0.0
    %1963 = vmatpush1.msra.mxu0 %v1889
    %1964 = vmatprep.subr.mxu0 0.0
    %1965 = vmatpush1.msra.mxu0 %v1887
    %1966 = vmatprep.subr.mxu0 0.0
    %1967 = vmatpush1.msra.mxu0 %v1885
    %1968 = vmatprep.subr.mxu0 0.0
    %1969 = vmatpush1.msra.mxu0 %v1883
    %1970 = vmatprep.subr.mxu0 0.0
    %1971 = vmatpush1.msra.mxu0 %v1881
    %1972 = vmatprep.subr.mxu0 0.0
    %1973 = vmatpush1.msra.mxu0 %v1879
    %1974 = vmatprep.subr.mxu0 0.0
    %1975 = vmatpush1.msra.mxu0 %v1877
    %1976 = vmatprep.subr.mxu0 0.0
    %1977 = vmatpush1.msra.mxu0 %v1875
    %1978 = vmatprep.subr.mxu0 0.0
    %1979 = vmatpush1.msra.mxu0 %v1873
    %1980 = vmatprep.subr.mxu0 0.0
    %1981 = vmatpush1.msra.mxu0 %v1871
    %1982 = vmatprep.subr.mxu0 0.0
    %1983 = vmatpush1.msra.mxu0 %v1869
    %1984 = vmatprep.subr.mxu0 0.0
    %1985 = vmatpush1.msra.mxu0 %v1867
    %1986 = vmatprep.subr.mxu0 0.0
    %1987 = vmatpush1.msra.mxu0 %v1865
    %1988 = vmatprep.subr.mxu0 0.0
    %1989 = vmatpush1.msra.mxu0 %v1863
    %1990 = vmatprep.subr.mxu0 0.0
    %1991 = vmatpush1.msra.mxu0 %v1861
    %1992 = vmatprep.subr.mxu0 0.0
    %1993 = vmatpush1.msra.mxu0 %v1859
    %1994 = vmatprep.subr.mxu0 0.0
    %1995 = vmatpush2.msra.mxu0 0.0
    %1996 = vmatprep.subr.mxu0 0.0
    %1997 = vmatpush2.msra.mxu0 0.0
    %1998 = vmatprep.subr.mxu0 0.0
    %1999 = vmatpush2.msra.mxu0 0.0
    %2000 = vmatprep.subr.mxu0 0.0
    %2001 = vmatpush2.msra.mxu0 0.0
    %2002 = vmatprep.subr.mxu0 0.0
    %2003 = vmatpush2.msra.mxu0 0.0
    %2004 = vmatprep.subr.mxu0 0.0
    %2005 = vmatpush2.msra.mxu0 0.0
    %2006 = vmatprep.subr.mxu0 0.0
    %2007 = vmatpush2.msra.mxu0 0.0
    %2008 = vmatprep.subr.mxu0 0.0
    %2009 = vmatpush2.msra.mxu0 0.0
    %2010 = vmatprep.subr.mxu0 0.0
    %2011 = vmatpush2.msra.mxu0 0.0
    %2012 = vmatprep.subr.mxu0 0.0
    %2013 = vmatpush2.msra.mxu0 0.0
    %2014 = vmatprep.subr.mxu0 0.0
    %2015 = vmatpush2.msra.mxu0 0.0
    %2016 = vmatprep.subr.mxu0 0.0
    %2017 = vmatpush2.msra.mxu0 0.0
    %2018 = vmatprep.subr.mxu0 0.0
    %2019 = vmatpush2.msra.mxu0 0.0
    %2020 = vmatprep.subr.mxu0 0.0
    %2021 = vmatpush2.msra.mxu0 0.0
    %2022 = vmatprep.subr.mxu0 0.0
    %2023 = vmatpush2.msra.mxu0 0.0
    %2024 = vmatprep.subr.mxu0 0.0
    %2025 = vmatpush2.msra.mxu0 0.0
    %2026 = vmatprep.mubr.f32.mxu0 0.0
    %2027 = vmatmul.mubr.f32.gmra.mxu0 %v958
    %v2028 = vpop.f32.mrf.mxu0
    %v2029 = vadd.f32 %v1959, %v2028
    %v2030 = vpop.f32.mrf.mxu0
    %2031 = vdwg.mxu0
    %v2032 = vadd.f32 %v1891, %v2029
    %vm2033 = vcmask 26624
    %2034 = vst.msk [vmem:[#allocation3] sm:$0x7] %vm2033, %v2032
    %v2035 = vld [vmem:[%s4] sm:$0xff]
    %v2037 = vcombine.high %v2035, %v2035
    %vm2038 = vcmask 31744
    %v2040 = vsel %vm2038, %v1795, 0
    %v2043 = vsel %vm2038, %v1797, 0
    %v2046 = vsel %vm2038, %v1799, 0
    %v2049 = vsel %vm2038, %v1801, 0
    %v2052 = vsel %vm2038, %v1803, 0
    %v2055 = vsel %vm2038, %v1805, 0
    %v2058 = vsel %vm2038, %v1807, 0
    %v2061 = vsel %vm2038, %v1809, 0
    %v2064 = vsel %vm2038, %v1811, 0
    %v2067 = vsel %vm2038, %v1813, 0
    %v2070 = vsel %vm2038, %v1815, 0
    %v2073 = vsel %vm2038, %v1817, 0
    %v2076 = vsel %vm2038, %v1819, 0
    %v2079 = vsel %vm2038, %v1821, 0
    %v2082 = vsel %vm2038, %v1823, 0
    %v2085 = vsel %vm2038, %v1825, 0
    %v2088 = vsel %vm2038, %v1827, 0
    %v2091 = vsel %vm2038, %v1829, 0
    %v2094 = vsel %vm2038, %v1831, 0
    %v2097 = vsel %vm2038, %v1833, 0
    %v2100 = vsel %vm2038, %v1835, 0
    %v2103 = vsel %vm2038, %v1837, 0
    %v2106 = vsel %vm2038, %v1839, 0
    %v2109 = vsel %vm2038, %v1841, 0
    %v2112 = vsel %vm2038, %v1843, 0
    %v2115 = vsel %vm2038, %v1845, 0
    %v2118 = vsel %vm2038, %v1847, 0
    %v2121 = vsel %vm2038, %v1849, 0
    %v2124 = vsel %vm2038, %v1851, 0
    %v2127 = vsel %vm2038, %v1853, 0
    %v2130 = vsel %vm2038, %v1855, 0
    %v2133 = vsel %vm2038, %v1857, 0
    %v2136 = vsel %vm2038, %v1859, 0
    %v2139 = vsel %vm2038, %v1861, 0
    %v2142 = vsel %vm2038, %v1863, 0
    %v2145 = vsel %vm2038, %v1865, 0
    %v2148 = vsel %vm2038, %v1867, 0
    %v2151 = vsel %vm2038, %v1869, 0
    %v2154 = vsel %vm2038, %v1871, 0
    %v2157 = vsel %vm2038, %v1873, 0
    %v2160 = vsel %vm2038, %v1875, 0
    %v2163 = vsel %vm2038, %v1877, 0
    %v2166 = vsel %vm2038, %v1879, 0
    %v2169 = vsel %vm2038, %v1881, 0
    %v2172 = vsel %vm2038, %v1883, 0
    %v2175 = vsel %vm2038, %v1885, 0
    %v2178 = vsel %vm2038, %v1887, 0
    %v2181 = vsel %vm2038, %v1889, 0
    %v2183 = vsel %vm1243, %v2035, 0
    %v2185 = vsel %vm1243, %v2037, 0
    %2187 = vmatprep.subr.mxu0 0.0
    %2188 = vmatpush1.msra.mxu0 0.0
    %2189 = vmatprep.subr.mxu0 0.0
    %2190 = vmatpush1.msra.mxu0 0.0
    %2191 = vmatprep.subr.mxu0 0.0
    %2192 = vmatpush1.msra.mxu0 0.0
    %2193 = vmatprep.subr.mxu0 0.0
    %2194 = vmatpush1.msra.mxu0 0.0
    %2195 = vmatprep.subr.mxu0 0.0
    %2196 = vmatpush1.msra.mxu0 0.0
    %2197 = vmatprep.subr.mxu0 0.0
    %2198 = vmatpush1.msra.mxu0 0.0
    %2199 = vmatprep.subr.mxu0 0.0
    %2200 = vmatpush1.msra.mxu0 0.0
    %2201 = vmatprep.subr.mxu0 0.0
    %2202 = vmatpush1.msra.mxu0 0.0
    %2203 = vmatprep.subr.mxu0 0.0
    %2204 = vmatpush1.msra.mxu0 0.0
    %2205 = vmatprep.subr.mxu0 0.0
    %2206 = vmatpush1.msra.mxu0 0.0
    %2207 = vmatprep.subr.mxu0 0.0
    %2208 = vmatpush1.msra.mxu0 0.0
    %2209 = vmatprep.subr.mxu0 0.0
    %2210 = vmatpush1.msra.mxu0 0.0
    %2211 = vmatprep.subr.mxu0 0.0
    %2212 = vmatpush1.msra.mxu0 0.0
    %2213 = vmatprep.subr.mxu0 0.0
    %2214 = vmatpush1.msra.mxu0 0.0
    %2215 = vmatprep.subr.mxu0 0.0
    %2216 = vmatpush1.msra.mxu0 0.0
    %2217 = vmatprep.subr.mxu0 %v2185
    %2218 = vmatpush1.msra.mxu0 %v2183
    %2219 = vmatprep.subr.mxu0 0.0
    %2220 = vmatpush2.msra.mxu0 0.0
    %2221 = vmatprep.subr.mxu0 0.0
    %2222 = vmatpush2.msra.mxu0 0.0
    %2223 = vmatprep.subr.mxu0 0.0
    %2224 = vmatpush2.msra.mxu0 0.0
    %2225 = vmatprep.subr.mxu0 0.0
    %2226 = vmatpush2.msra.mxu0 0.0
    %2227 = vmatprep.subr.mxu0 0.0
    %2228 = vmatpush2.msra.mxu0 0.0
    %2229 = vmatprep.subr.mxu0 0.0
    %2230 = vmatpush2.msra.mxu0 0.0
    %2231 = vmatprep.subr.mxu0 0.0
    %2232 = vmatpush2.msra.mxu0 0.0
    %2233 = vmatprep.subr.mxu0 0.0
    %2234 = vmatpush2.msra.mxu0 0.0
    %2235 = vmatprep.subr.mxu0 0.0
    %2236 = vmatpush2.msra.mxu0 0.0
    %2237 = vmatprep.subr.mxu0 0.0
    %2238 = vmatpush2.msra.mxu0 0.0
    %2239 = vmatprep.subr.mxu0 0.0
    %2240 = vmatpush2.msra.mxu0 0.0
    %2241 = vmatprep.subr.mxu0 0.0
    %2242 = vmatpush2.msra.mxu0 0.0
    %2243 = vmatprep.subr.mxu0 0.0
    %2244 = vmatpush2.msra.mxu0 0.0
    %2245 = vmatprep.subr.mxu0 0.0
    %2246 = vmatpush2.msra.mxu0 0.0
    %2247 = vmatprep.subr.mxu0 0.0
    %2248 = vmatpush2.msra.mxu0 0.0
    %2249 = vmatprep.subr.mxu0 0.0
    %2250 = vmatpush2.msra.mxu0 0.0
    %2251 = vmatprep.mubr.f32.mxu0 0.0
    %2252 = vmatmul.mubr.f32.gmra.mxu0 %v2040
    %v2253 = vpop.f32.mrf.mxu0
    %v2254 = vadd.f32 0.0, %v2253
    %v2255 = vpop.f32.mrf.mxu0
    %v2256 = vadd.f32 0.0, %v2255
    %2257 = vmatprep.mubr.f32.mxu0 0.0
    %2258 = vmatmul.mubr.f32.gmra.mxu0 %v2043
    %v2259 = vpop.f32.mrf.mxu0
    %v2260 = vadd.f32 0.0, %v2259
    %v2261 = vpop.f32.mrf.mxu0
    %v2262 = vadd.f32 0.0, %v2261
    %2263 = vmatprep.mubr.f32.mxu0 0.0
    %2264 = vmatmul.mubr.f32.gmra.mxu0 %v2046
    %v2265 = vpop.f32.mrf.mxu0
    %v2266 = vadd.f32 0.0, %v2265
    %v2267 = vpop.f32.mrf.mxu0
    %v2268 = vadd.f32 0.0, %v2267
    %2269 = vmatprep.mubr.f32.mxu0 0.0
    %2270 = vmatmul.mubr.f32.gmra.mxu0 %v2049
    %v2271 = vpop.f32.mrf.mxu0
    %v2272 = vadd.f32 0.0, %v2271
    %v2273 = vpop.f32.mrf.mxu0
    %v2274 = vadd.f32 0.0, %v2273
    %2275 = vmatprep.mubr.f32.mxu0 0.0
    %2276 = vmatmul.mubr.f32.gmra.mxu0 %v2052
    %v2277 = vpop.f32.mrf.mxu0
    %v2278 = vadd.f32 0.0, %v2277
    %v2279 = vpop.f32.mrf.mxu0
    %v2280 = vadd.f32 0.0, %v2279
    %2281 = vmatprep.mubr.f32.mxu0 0.0
    %2282 = vmatmul.mubr.f32.gmra.mxu0 %v2055
    %v2283 = vpop.f32.mrf.mxu0
    %v2284 = vadd.f32 0.0, %v2283
    %v2285 = vpop.f32.mrf.mxu0
    %v2286 = vadd.f32 0.0, %v2285
    %2287 = vmatprep.mubr.f32.mxu0 0.0
    %2288 = vmatmul.mubr.f32.gmra.mxu0 %v2058
    %v2289 = vpop.f32.mrf.mxu0
    %v2290 = vadd.f32 0.0, %v2289
    %v2291 = vpop.f32.mrf.mxu0
    %v2292 = vadd.f32 0.0, %v2291
    %2293 = vmatprep.mubr.f32.mxu0 0.0
    %2294 = vmatmul.mubr.f32.gmra.mxu0 %v2061
    %v2295 = vpop.f32.mrf.mxu0
    %v2296 = vadd.f32 0.0, %v2295
    %v2297 = vpop.f32.mrf.mxu0
    %v2298 = vadd.f32 0.0, %v2297
    %2299 = vmatprep.mubr.f32.mxu0 0.0
    %2300 = vmatmul.mubr.f32.gmra.mxu0 %v2064
    %v2301 = vpop.f32.mrf.mxu0
    %v2302 = vadd.f32 0.0, %v2301
    %v2303 = vpop.f32.mrf.mxu0
    %v2304 = vadd.f32 0.0, %v2303
    %2305 = vmatprep.mubr.f32.mxu0 0.0
    %2306 = vmatmul.mubr.f32.gmra.mxu0 %v2067
    %v2307 = vpop.f32.mrf.mxu0
    %v2308 = vadd.f32 0.0, %v2307
    %v2309 = vpop.f32.mrf.mxu0
    %v2310 = vadd.f32 0.0, %v2309
    %2311 = vmatprep.mubr.f32.mxu0 0.0
    %2312 = vmatmul.mubr.f32.gmra.mxu0 %v2070
    %v2313 = vpop.f32.mrf.mxu0
    %v2314 = vadd.f32 0.0, %v2313
    %v2315 = vpop.f32.mrf.mxu0
    %v2316 = vadd.f32 0.0, %v2315
    %2317 = vmatprep.mubr.f32.mxu0 0.0
    %2318 = vmatmul.mubr.f32.gmra.mxu0 %v2073
    %v2319 = vpop.f32.mrf.mxu0
    %v2320 = vadd.f32 0.0, %v2319
    %v2321 = vpop.f32.mrf.mxu0
    %v2322 = vadd.f32 0.0, %v2321
    %2323 = vmatprep.mubr.f32.mxu0 0.0
    %2324 = vmatmul.mubr.f32.gmra.mxu0 %v2076
    %v2325 = vpop.f32.mrf.mxu0
    %v2326 = vadd.f32 0.0, %v2325
    %v2327 = vpop.f32.mrf.mxu0
    %v2328 = vadd.f32 0.0, %v2327
    %2329 = vmatprep.mubr.f32.mxu0 0.0
    %2330 = vmatmul.mubr.f32.gmra.mxu0 %v2079
    %v2331 = vpop.f32.mrf.mxu0
    %v2332 = vadd.f32 0.0, %v2331
    %v2333 = vpop.f32.mrf.mxu0
    %v2334 = vadd.f32 0.0, %v2333
    %2335 = vmatprep.mubr.f32.mxu0 0.0
    %2336 = vmatmul.mubr.f32.gmra.mxu0 %v2082
    %v2337 = vpop.f32.mrf.mxu0
    %v2338 = vadd.f32 0.0, %v2337
    %v2339 = vpop.f32.mrf.mxu0
    %v2340 = vadd.f32 0.0, %v2339
    %2341 = vmatprep.mubr.f32.mxu0 0.0
    %2342 = vmatmul.mubr.f32.gmra.mxu0 %v2085
    %v2343 = vpop.f32.mrf.mxu0
    %v2344 = vadd.f32 0.0, %v2343
    %v2345 = vpop.f32.mrf.mxu0
    %v2346 = vadd.f32 0.0, %v2345
    %2347 = vmatprep.mubr.f32.mxu0 0.0
    %2348 = vmatmul.mubr.f32.gmra.mxu0 %v2088
    %v2349 = vpop.f32.mrf.mxu0
    %v2350 = vadd.f32 0.0, %v2349
    %v2351 = vpop.f32.mrf.mxu0
    %v2352 = vadd.f32 0.0, %v2351
    %2353 = vmatprep.mubr.f32.mxu0 0.0
    %2354 = vmatmul.mubr.f32.gmra.mxu0 %v2091
    %v2355 = vpop.f32.mrf.mxu0
    %v2356 = vadd.f32 0.0, %v2355
    %v2357 = vpop.f32.mrf.mxu0
    %v2358 = vadd.f32 0.0, %v2357
    %2359 = vmatprep.mubr.f32.mxu0 0.0
    %2360 = vmatmul.mubr.f32.gmra.mxu0 %v2094
    %v2361 = vpop.f32.mrf.mxu0
    %v2362 = vadd.f32 0.0, %v2361
    %v2363 = vpop.f32.mrf.mxu0
    %v2364 = vadd.f32 0.0, %v2363
    %2365 = vmatprep.mubr.f32.mxu0 0.0
    %2366 = vmatmul.mubr.f32.gmra.mxu0 %v2097
    %v2367 = vpop.f32.mrf.mxu0
    %v2368 = vadd.f32 0.0, %v2367
    %v2369 = vpop.f32.mrf.mxu0
    %v2370 = vadd.f32 0.0, %v2369
    %2371 = vmatprep.mubr.f32.mxu0 0.0
    %2372 = vmatmul.mubr.f32.gmra.mxu0 %v2100
    %v2373 = vpop.f32.mrf.mxu0
    %v2374 = vadd.f32 0.0, %v2373
    %v2375 = vpop.f32.mrf.mxu0
    %v2376 = vadd.f32 0.0, %v2375
    %2377 = vmatprep.mubr.f32.mxu0 0.0
    %2378 = vmatmul.mubr.f32.gmra.mxu0 %v2103
    %v2379 = vpop.f32.mrf.mxu0
    %v2380 = vadd.f32 0.0, %v2379
    %v2381 = vpop.f32.mrf.mxu0
    %v2382 = vadd.f32 0.0, %v2381
    %2383 = vmatprep.mubr.f32.mxu0 0.0
    %2384 = vmatmul.mubr.f32.gmra.mxu0 %v2106
    %v2385 = vpop.f32.mrf.mxu0
    %v2386 = vadd.f32 0.0, %v2385
    %v2387 = vpop.f32.mrf.mxu0
    %v2388 = vadd.f32 0.0, %v2387
    %2389 = vmatprep.mubr.f32.mxu0 0.0
    %2390 = vmatmul.mubr.f32.gmra.mxu0 %v2109
    %v2391 = vpop.f32.mrf.mxu0
    %v2392 = vadd.f32 0.0, %v2391
    %v2393 = vpop.f32.mrf.mxu0
    %v2394 = vadd.f32 0.0, %v2393
    %2395 = vmatprep.mubr.f32.mxu0 0.0
    %2396 = vmatmul.mubr.f32.gmra.mxu0 %v2112
    %v2397 = vpop.f32.mrf.mxu0
    %v2398 = vadd.f32 0.0, %v2397
    %v2399 = vpop.f32.mrf.mxu0
    %v2400 = vadd.f32 0.0, %v2399
    %2401 = vmatprep.mubr.f32.mxu0 0.0
    %2402 = vmatmul.mubr.f32.gmra.mxu0 %v2115
    %v2403 = vpop.f32.mrf.mxu0
    %v2404 = vadd.f32 0.0, %v2403
    %v2405 = vpop.f32.mrf.mxu0
    %v2406 = vadd.f32 0.0, %v2405
    %2407 = vmatprep.mubr.f32.mxu0 0.0
    %2408 = vmatmul.mubr.f32.gmra.mxu0 %v2118
    %v2409 = vpop.f32.mrf.mxu0
    %v2410 = vadd.f32 0.0, %v2409
    %v2411 = vpop.f32.mrf.mxu0
    %v2412 = vadd.f32 0.0, %v2411
    %2413 = vmatprep.mubr.f32.mxu0 0.0
    %2414 = vmatmul.mubr.f32.gmra.mxu0 %v2121
    %v2415 = vpop.f32.mrf.mxu0
    %v2416 = vadd.f32 0.0, %v2415
    %v2417 = vpop.f32.mrf.mxu0
    %v2418 = vadd.f32 0.0, %v2417
    %2419 = vmatprep.mubr.f32.mxu0 0.0
    %2420 = vmatmul.mubr.f32.gmra.mxu0 %v2124
    %v2421 = vpop.f32.mrf.mxu0
    %v2422 = vadd.f32 0.0, %v2421
    %v2423 = vpop.f32.mrf.mxu0
    %v2424 = vadd.f32 0.0, %v2423
    %2425 = vmatprep.mubr.f32.mxu0 0.0
    %2426 = vmatmul.mubr.f32.gmra.mxu0 %v2127
    %v2427 = vpop.f32.mrf.mxu0
    %v2428 = vadd.f32 0.0, %v2427
    %v2429 = vpop.f32.mrf.mxu0
    %v2430 = vadd.f32 0.0, %v2429
    %2431 = vmatprep.mubr.f32.mxu0 0.0
    %2432 = vmatmul.mubr.f32.gmra.mxu0 %v2130
    %v2433 = vpop.f32.mrf.mxu0
    %v2434 = vadd.f32 0.0, %v2433
    %v2435 = vpop.f32.mrf.mxu0
    %v2436 = vadd.f32 0.0, %v2435
    %2437 = vmatprep.mubr.f32.mxu0 0.0
    %2438 = vmatmul.mubr.f32.gmra.mxu0 %v2133
    %v2439 = vpop.f32.mrf.mxu0
    %v2440 = vadd.f32 0.0, %v2439
    %v2441 = vpop.f32.mrf.mxu0
    %v2442 = vadd.f32 0.0, %v2441
    %2443 = vmatprep.mubr.f32.mxu0 0.0
    %2444 = vmatmul.mubr.f32.gmra.mxu0 %v2136
    %v2445 = vpop.f32.mrf.mxu0
    %v2446 = vadd.f32 0.0, %v2445
    %v2447 = vpop.f32.mrf.mxu0
    %v2448 = vadd.f32 0.0, %v2447
    %2449 = vmatprep.mubr.f32.mxu0 0.0
    %2450 = vmatmul.mubr.f32.gmra.mxu0 %v2139
    %v2451 = vpop.f32.mrf.mxu0
    %v2452 = vadd.f32 0.0, %v2451
    %v2453 = vpop.f32.mrf.mxu0
    %v2454 = vadd.f32 0.0, %v2453
    %2455 = vmatprep.mubr.f32.mxu0 0.0
    %2456 = vmatmul.mubr.f32.gmra.mxu0 %v2142
    %v2457 = vpop.f32.mrf.mxu0
    %v2458 = vadd.f32 0.0, %v2457
    %v2459 = vpop.f32.mrf.mxu0
    %v2460 = vadd.f32 0.0, %v2459
    %2461 = vmatprep.mubr.f32.mxu0 0.0
    %2462 = vmatmul.mubr.f32.gmra.mxu0 %v2145
    %v2463 = vpop.f32.mrf.mxu0
    %v2464 = vadd.f32 0.0, %v2463
    %v2465 = vpop.f32.mrf.mxu0
    %v2466 = vadd.f32 0.0, %v2465
    %2467 = vmatprep.mubr.f32.mxu0 0.0
    %2468 = vmatmul.mubr.f32.gmra.mxu0 %v2148
    %v2469 = vpop.f32.mrf.mxu0
    %v2470 = vadd.f32 0.0, %v2469
    %v2471 = vpop.f32.mrf.mxu0
    %v2472 = vadd.f32 0.0, %v2471
    %2473 = vmatprep.mubr.f32.mxu0 0.0
    %2474 = vmatmul.mubr.f32.gmra.mxu0 %v2151
    %v2475 = vpop.f32.mrf.mxu0
    %v2476 = vadd.f32 0.0, %v2475
    %v2477 = vpop.f32.mrf.mxu0
    %v2478 = vadd.f32 0.0, %v2477
    %2479 = vmatprep.mubr.f32.mxu0 0.0
    %2480 = vmatmul.mubr.f32.gmra.mxu0 %v2154
    %v2481 = vpop.f32.mrf.mxu0
    %v2482 = vadd.f32 0.0, %v2481
    %v2483 = vpop.f32.mrf.mxu0
    %v2484 = vadd.f32 0.0, %v2483
    %2485 = vmatprep.mubr.f32.mxu0 0.0
    %2486 = vmatmul.mubr.f32.gmra.mxu0 %v2157
    %v2487 = vpop.f32.mrf.mxu0
    %v2488 = vadd.f32 0.0, %v2487
    %v2489 = vpop.f32.mrf.mxu0
    %v2490 = vadd.f32 0.0, %v2489
    %2491 = vmatprep.mubr.f32.mxu0 0.0
    %2492 = vmatmul.mubr.f32.gmra.mxu0 %v2160
    %v2493 = vpop.f32.mrf.mxu0
    %v2494 = vadd.f32 0.0, %v2493
    %v2495 = vpop.f32.mrf.mxu0
    %v2496 = vadd.f32 0.0, %v2495
    %2497 = vmatprep.mubr.f32.mxu0 0.0
    %2498 = vmatmul.mubr.f32.gmra.mxu0 %v2163
    %v2499 = vpop.f32.mrf.mxu0
    %v2500 = vadd.f32 0.0, %v2499
    %v2501 = vpop.f32.mrf.mxu0
    %v2502 = vadd.f32 0.0, %v2501
    %2503 = vmatprep.mubr.f32.mxu0 0.0
    %2504 = vmatmul.mubr.f32.gmra.mxu0 %v2166
    %v2505 = vpop.f32.mrf.mxu0
    %v2506 = vadd.f32 0.0, %v2505
    %v2507 = vpop.f32.mrf.mxu0
    %v2508 = vadd.f32 0.0, %v2507
    %2509 = vmatprep.mubr.f32.mxu0 0.0
    %2510 = vmatmul.mubr.f32.gmra.mxu0 %v2169
    %v2511 = vpop.f32.mrf.mxu0
    %v2512 = vadd.f32 0.0, %v2511
    %v2513 = vpop.f32.mrf.mxu0
    %v2514 = vadd.f32 0.0, %v2513
    %2515 = vmatprep.mubr.f32.mxu0 0.0
    %2516 = vmatmul.mubr.f32.gmra.mxu0 %v2172
    %v2517 = vpop.f32.mrf.mxu0
    %v2518 = vadd.f32 0.0, %v2517
    %v2519 = vpop.f32.mrf.mxu0
    %v2520 = vadd.f32 0.0, %v2519
    %2521 = vmatprep.mubr.f32.mxu0 0.0
    %2522 = vmatmul.mubr.f32.gmra.mxu0 %v2175
    %v2523 = vpop.f32.mrf.mxu0
    %v2524 = vadd.f32 0.0, %v2523
    %v2525 = vpop.f32.mrf.mxu0
    %v2526 = vadd.f32 0.0, %v2525
    %2527 = vmatprep.mubr.f32.mxu0 0.0
    %2528 = vmatmul.mubr.f32.gmra.mxu0 %v2178
    %v2529 = vpop.f32.mrf.mxu0
    %v2530 = vadd.f32 0.0, %v2529
    %v2531 = vpop.f32.mrf.mxu0
    %v2532 = vadd.f32 0.0, %v2531
    %2533 = vmatprep.mubr.f32.mxu0 0.0
    %2534 = vmatmul.mubr.f32.gmra.mxu0 %v2181
    %v2535 = vpop.f32.mrf.mxu0
    %v2536 = vadd.f32 0.0, %v2535
    %v2537 = vpop.f32.mrf.mxu0
    %v2538 = vadd.f32 0.0, %v2537
    %2539 = vdwg.mxu0
    %v2541 = vsel %vm2038, %v1291, 0
    %2543 = vmatprep.subr.mxu0 0.0
    %2544 = vmatpush1.msra.mxu0 0.0
    %2545 = vmatprep.subr.mxu0 0.0
    %2546 = vmatpush1.msra.mxu0 0.0
    %2547 = vmatprep.subr.mxu0 0.0
    %2548 = vmatpush1.msra.mxu0 0.0
    %2549 = vmatprep.subr.mxu0 0.0
    %2550 = vmatpush1.msra.mxu0 0.0
    %2551 = vmatprep.subr.mxu0 0.0
    %2552 = vmatpush1.msra.mxu0 0.0
    %2553 = vmatprep.subr.mxu0 0.0
    %2554 = vmatpush1.msra.mxu0 0.0
    %2555 = vmatprep.subr.mxu0 0.0
    %2556 = vmatpush1.msra.mxu0 0.0
    %2557 = vmatprep.subr.mxu0 0.0
    %2558 = vmatpush1.msra.mxu0 0.0
    %2559 = vmatprep.subr.mxu0 0.0
    %2560 = vmatpush1.msra.mxu0 0.0
    %2561 = vmatprep.subr.mxu0 0.0
    %2562 = vmatpush1.msra.mxu0 0.0
    %2563 = vmatprep.subr.mxu0 0.0
    %2564 = vmatpush1.msra.mxu0 0.0
    %2565 = vmatprep.subr.mxu0 0.0
    %2566 = vmatpush1.msra.mxu0 0.0
    %2567 = vmatprep.subr.mxu0 0.0
    %2568 = vmatpush1.msra.mxu0 0.0
    %2569 = vmatprep.subr.mxu0 0.0
    %2570 = vmatpush1.msra.mxu0 0.0
    %2571 = vmatprep.subr.mxu0 0.0
    %2572 = vmatpush1.msra.mxu0 0.0
    %2573 = vmatprep.subr.mxu0 %v2185
    %2574 = vmatpush1.msra.mxu0 %v2183
    %2575 = vmatprep.subr.mxu0 0.0
    %2576 = vmatpush2.msra.mxu0 0.0
    %2577 = vmatprep.subr.mxu0 0.0
    %2578 = vmatpush2.msra.mxu0 0.0
    %2579 = vmatprep.subr.mxu0 0.0
    %2580 = vmatpush2.msra.mxu0 0.0
    %2581 = vmatprep.subr.mxu0 0.0
    %2582 = vmatpush2.msra.mxu0 0.0
    %2583 = vmatprep.subr.mxu0 0.0
    %2584 = vmatpush2.msra.mxu0 0.0
    %2585 = vmatprep.subr.mxu0 0.0
    %2586 = vmatpush2.msra.mxu0 0.0
    %2587 = vmatprep.subr.mxu0 0.0
    %2588 = vmatpush2.msra.mxu0 0.0
    %2589 = vmatprep.subr.mxu0 0.0
    %2590 = vmatpush2.msra.mxu0 0.0
    %2591 = vmatprep.subr.mxu0 0.0
    %2592 = vmatpush2.msra.mxu0 0.0
    %2593 = vmatprep.subr.mxu0 0.0
    %2594 = vmatpush2.msra.mxu0 0.0
    %2595 = vmatprep.subr.mxu0 0.0
    %2596 = vmatpush2.msra.mxu0 0.0
    %2597 = vmatprep.subr.mxu0 0.0
    %2598 = vmatpush2.msra.mxu0 0.0
    %2599 = vmatprep.subr.mxu0 0.0
    %2600 = vmatpush2.msra.mxu0 0.0
    %2601 = vmatprep.subr.mxu0 0.0
    %2602 = vmatpush2.msra.mxu0 0.0
    %2603 = vmatprep.subr.mxu0 0.0
    %2604 = vmatpush2.msra.mxu0 0.0
    %2605 = vmatprep.subr.mxu0 0.0
    %2606 = vmatpush2.msra.mxu0 0.0
    %2607 = vmatprep.mubr.f32.mxu0 0.0
    %2608 = vmatmul.mubr.f32.gmra.mxu0 %v2541
    %v2609 = vpop.f32.mrf.mxu0
    %v2610 = vadd.f32 0.0, %v2609
    %v2611 = vpop.f32.mrf.mxu0
    %v2612 = vadd.f32 0.0, %v2611
    %2613 = vdwg.mxu0
    %v2614 = vld [vmem:[#allocation4] sm:$0x77]
    %v2616 = vcombine.high %v2614, %v2614
    %v2618 = vmul.f32 %v2610, %v2614
    %v2619 = vmul.f32 %v2612, %v2616
    %v2620 = vmul.f32 %v2254, %v360
    %v2621 = vmul.f32 %v2256, %v362
    %v2622 = vmul.f32 %v2260, %v364
    %v2623 = vmul.f32 %v2262, %v366
    %v2624 = vmul.f32 %v2266, %v370
    %v2625 = vmul.f32 %v2268, %v372
    %v2626 = vmul.f32 %v2272, %v374
    %v2627 = vmul.f32 %v2274, %v376
    %v2628 = vmul.f32 %v2278, %v380
    %v2629 = vmul.f32 %v2280, %v382
    %v2630 = vmul.f32 %v2284, %v384
    %v2631 = vmul.f32 %v2286, %v386
    %v2632 = vmul.f32 %v2290, %v390
    %v2633 = vmul.f32 %v2292, %v392
    %v2634 = vmul.f32 %v2296, %v394
    %v2635 = vmul.f32 %v2298, %v396
    %v2636 = vmul.f32 %v2302, %v400
    %v2637 = vmul.f32 %v2304, %v402
    %v2638 = vmul.f32 %v2308, %v404
    %v2639 = vmul.f32 %v2310, %v406
    %v2640 = vmul.f32 %v2314, %v410
    %v2641 = vmul.f32 %v2316, %v412
    %v2642 = vmul.f32 %v2320, %v414
    %v2643 = vmul.f32 %v2322, %v416
    %v2644 = vmul.f32 %v2326, %v420
    %v2645 = vmul.f32 %v2328, %v422
    %v2646 = vmul.f32 %v2332, %v424
    %v2647 = vmul.f32 %v2334, %v426
    %v2648 = vmul.f32 %v2338, %v430
    %v2649 = vmul.f32 %v2340, %v432
    %v2650 = vmul.f32 %v2344, %v434
    %v2651 = vmul.f32 %v2346, %v436
    %v2652 = vmul.f32 %v2350, %v440
    %v2653 = vmul.f32 %v2352, %v442
    %v2654 = vmul.f32 %v2356, %v444
    %v2655 = vmul.f32 %v2358, %v446
    %v2656 = vmul.f32 %v2362, %v450
    %v2657 = vmul.f32 %v2364, %v452
    %v2658 = vmul.f32 %v2368, %v454
    %v2659 = vmul.f32 %v2370, %v456
    %v2660 = vmul.f32 %v2374, %v460
    %v2661 = vmul.f32 %v2376, %v462
    %v2662 = vmul.f32 %v2380, %v464
    %v2663 = vmul.f32 %v2382, %v466
    %v2664 = vmul.f32 %v2386, %v470
    %v2665 = vmul.f32 %v2388, %v472
    %v2666 = vmul.f32 %v2392, %v474
    %v2667 = vmul.f32 %v2394, %v476
    %v2668 = vmul.f32 %v2398, %v480
    %v2669 = vmul.f32 %v2400, %v482
    %v2670 = vmul.f32 %v2404, %v484
    %v2671 = vmul.f32 %v2406, %v486
    %v2672 = vmul.f32 %v2410, %v490
    %v2673 = vmul.f32 %v2412, %v492
    %v2674 = vmul.f32 %v2416, %v494
    %v2675 = vmul.f32 %v2418, %v496
    %v2676 = vmul.f32 %v2422, %v500
    %v2677 = vmul.f32 %v2424, %v502
    %v2678 = vmul.f32 %v2428, %v504
    %v2679 = vmul.f32 %v2430, %v506
    %v2680 = vmul.f32 %v2434, %v510
    %v2681 = vmul.f32 %v2436, %v512
    %v2682 = vmul.f32 %v2440, %v514
    %v2683 = vmul.f32 %v2442, %v516
    %v2684 = vmul.f32 %v2446, %v520
    %v2685 = vmul.f32 %v2448, %v522
    %v2686 = vmul.f32 %v2452, %v524
    %v2687 = vmul.f32 %v2454, %v526
    %v2688 = vmul.f32 %v2458, %v530
    %v2689 = vmul.f32 %v2460, %v532
    %v2690 = vmul.f32 %v2464, %v534
    %v2691 = vmul.f32 %v2466, %v536
    %v2692 = vmul.f32 %v2470, %v540
    %v2693 = vmul.f32 %v2472, %v542
    %v2694 = vmul.f32 %v2476, %v544
    %v2695 = vmul.f32 %v2478, %v546
    %v2696 = vmul.f32 %v2482, %v550
    %v2697 = vmul.f32 %v2484, %v552
    %v2698 = vmul.f32 %v2488, %v554
    %v2699 = vmul.f32 %v2490, %v556
    %v2700 = vmul.f32 %v2494, %v560
    %v2701 = vmul.f32 %v2496, %v562
    %v2702 = vmul.f32 %v2500, %v564
    %v2703 = vmul.f32 %v2502, %v566
    %v2704 = vmul.f32 %v2506, %v570
    %v2705 = vmul.f32 %v2508, %v572
    %v2706 = vmul.f32 %v2512, %v574
    %v2707 = vmul.f32 %v2514, %v576
    %v2708 = vmul.f32 %v2518, %v580
    %v2709 = vmul.f32 %v2520, %v582
    %v2710 = vmul.f32 %v2524, %v584
    %v2711 = vmul.f32 %v2526, %v586
    %v2712 = vmul.f32 %v2530, %v590
    %v2713 = vmul.f32 %v2532, %v592
    %v2714 = vmul.f32 %v2536, %v594
    %v2715 = vmul.f32 %v2538, %v596
    %2716 = vmatprep.subr.mxu0 %v2651
    %2717 = vmatpush1.msra.mxu0 %v2650
    %2718 = vmatprep.subr.mxu0 %v2649
    %2719 = vmatpush1.msra.mxu0 %v2648
    %2720 = vmatprep.subr.mxu0 %v2647
    %2721 = vmatpush1.msra.mxu0 %v2646
    %2722 = vmatprep.subr.mxu0 %v2645
    %2723 = vmatpush1.msra.mxu0 %v2644
    %2724 = vmatprep.subr.mxu0 %v2643
    %2725 = vmatpush1.msra.mxu0 %v2642
    %2726 = vmatprep.subr.mxu0 %v2641
    %2727 = vmatpush1.msra.mxu0 %v2640
    %2728 = vmatprep.subr.mxu0 %v2639
    %2729 = vmatpush1.msra.mxu0 %v2638
    %2730 = vmatprep.subr.mxu0 %v2637
    %2731 = vmatpush1.msra.mxu0 %v2636
    %2732 = vmatprep.subr.mxu0 %v2635
    %2733 = vmatpush1.msra.mxu0 %v2634
    %2734 = vmatprep.subr.mxu0 %v2633
    %2735 = vmatpush1.msra.mxu0 %v2632
    %2736 = vmatprep.subr.mxu0 %v2631
    %2737 = vmatpush1.msra.mxu0 %v2630
    %2738 = vmatprep.subr.mxu0 %v2629
    %2739 = vmatpush1.msra.mxu0 %v2628
    %2740 = vmatprep.subr.mxu0 %v2627
    %2741 = vmatpush1.msra.mxu0 %v2626
    %2742 = vmatprep.subr.mxu0 %v2625
    %2743 = vmatpush1.msra.mxu0 %v2624
    %2744 = vmatprep.subr.mxu0 %v2623
    %2745 = vmatpush1.msra.mxu0 %v2622
    %2746 = vmatprep.subr.mxu0 %v2621
    %2747 = vmatpush1.msra.mxu0 %v2620
    %2748 = vmatprep.subr.mxu0 %v2683
    %2749 = vmatpush2.msra.mxu0 %v2682
    %2750 = vmatprep.subr.mxu0 %v2681
    %2751 = vmatpush2.msra.mxu0 %v2680
    %2752 = vmatprep.subr.mxu0 %v2679
    %2753 = vmatpush2.msra.mxu0 %v2678
    %2754 = vmatprep.subr.mxu0 %v2677
    %2755 = vmatpush2.msra.mxu0 %v2676
    %2756 = vmatprep.subr.mxu0 %v2675
    %2757 = vmatpush2.msra.mxu0 %v2674
    %2758 = vmatprep.subr.mxu0 %v2673
    %2759 = vmatpush2.msra.mxu0 %v2672
    %2760 = vmatprep.subr.mxu0 %v2671
    %2761 = vmatpush2.msra.mxu0 %v2670
    %2762 = vmatprep.subr.mxu0 %v2669
    %2763 = vmatpush2.msra.mxu0 %v2668
    %2764 = vmatprep.subr.mxu0 %v2667
    %2765 = vmatpush2.msra.mxu0 %v2666
    %2766 = vmatprep.subr.mxu0 %v2665
    %2767 = vmatpush2.msra.mxu0 %v2664
    %2768 = vmatprep.subr.mxu0 %v2663
    %2769 = vmatpush2.msra.mxu0 %v2662
    %2770 = vmatprep.subr.mxu0 %v2661
    %2771 = vmatpush2.msra.mxu0 %v2660
    %2772 = vmatprep.subr.mxu0 %v2659
    %2773 = vmatpush2.msra.mxu0 %v2658
    %2774 = vmatprep.subr.mxu0 %v2657
    %2775 = vmatpush2.msra.mxu0 %v2656
    %2776 = vmatprep.subr.mxu0 %v2655
    %2777 = vmatpush2.msra.mxu0 %v2654
    %2778 = vmatprep.subr.mxu0 %v2653
    %2779 = vmatpush2.msra.mxu0 %v2652
    %2780 = vmatprep.mubr.f32.mxu0 %v957
    %2781 = vmatmul.mubr.f32.gmra.mxu0 %v956
    %v2782 = vpop.f32.mrf.mxu0
    %v2783 = vadd.f32 0.0, %v2782
    %v2784 = vpop.f32.mrf.mxu0
    %v2785 = vadd.f32 0.0, %v2784
    %2786 = vdwg.mxu0
    %2787 = vmatprep.subr.mxu0 %v2715
    %2788 = vmatpush1.msra.mxu0 %v2714
    %2789 = vmatprep.subr.mxu0 %v2713
    %2790 = vmatpush1.msra.mxu0 %v2712
    %2791 = vmatprep.subr.mxu0 %v2711
    %2792 = vmatpush1.msra.mxu0 %v2710
    %2793 = vmatprep.subr.mxu0 %v2709
    %2794 = vmatpush1.msra.mxu0 %v2708
    %2795 = vmatprep.subr.mxu0 %v2707
    %2796 = vmatpush1.msra.mxu0 %v2706
    %2797 = vmatprep.subr.mxu0 %v2705
    %2798 = vmatpush1.msra.mxu0 %v2704
    %2799 = vmatprep.subr.mxu0 %v2703
    %2800 = vmatpush1.msra.mxu0 %v2702
    %2801 = vmatprep.subr.mxu0 %v2701
    %2802 = vmatpush1.msra.mxu0 %v2700
    %2803 = vmatprep.subr.mxu0 %v2699
    %2804 = vmatpush1.msra.mxu0 %v2698
    %2805 = vmatprep.subr.mxu0 %v2697
    %2806 = vmatpush1.msra.mxu0 %v2696
    %2807 = vmatprep.subr.mxu0 %v2695
    %2808 = vmatpush1.msra.mxu0 %v2694
    %2809 = vmatprep.subr.mxu0 %v2693
    %2810 = vmatpush1.msra.mxu0 %v2692
    %2811 = vmatprep.subr.mxu0 %v2691
    %2812 = vmatpush1.msra.mxu0 %v2690
    %2813 = vmatprep.subr.mxu0 %v2689
    %2814 = vmatpush1.msra.mxu0 %v2688
    %2815 = vmatprep.subr.mxu0 %v2687
    %2816 = vmatpush1.msra.mxu0 %v2686
    %2817 = vmatprep.subr.mxu0 %v2685
    %2818 = vmatpush1.msra.mxu0 %v2684
    %2819 = vmatprep.subr.mxu0 0.0
    %2820 = vmatpush2.msra.mxu0 0.0
    %2821 = vmatprep.subr.mxu0 0.0
    %2822 = vmatpush2.msra.mxu0 0.0
    %2823 = vmatprep.subr.mxu0 0.0
    %2824 = vmatpush2.msra.mxu0 0.0
    %2825 = vmatprep.subr.mxu0 0.0
    %2826 = vmatpush2.msra.mxu0 0.0
    %2827 = vmatprep.subr.mxu0 0.0
    %2828 = vmatpush2.msra.mxu0 0.0
    %2829 = vmatprep.subr.mxu0 0.0
    %2830 = vmatpush2.msra.mxu0 0.0
    %2831 = vmatprep.subr.mxu0 0.0
    %2832 = vmatpush2.msra.mxu0 0.0
    %2833 = vmatprep.subr.mxu0 0.0
    %2834 = vmatpush2.msra.mxu0 0.0
    %2835 = vmatprep.subr.mxu0 0.0
    %2836 = vmatpush2.msra.mxu0 0.0
    %2837 = vmatprep.subr.mxu0 0.0
    %2838 = vmatpush2.msra.mxu0 0.0
    %2839 = vmatprep.subr.mxu0 0.0
    %2840 = vmatpush2.msra.mxu0 0.0
    %2841 = vmatprep.subr.mxu0 0.0
    %2842 = vmatpush2.msra.mxu0 0.0
    %2843 = vmatprep.subr.mxu0 0.0
    %2844 = vmatpush2.msra.mxu0 0.0
    %2845 = vmatprep.subr.mxu0 0.0
    %2846 = vmatpush2.msra.mxu0 0.0
    %2847 = vmatprep.subr.mxu0 0.0
    %2848 = vmatpush2.msra.mxu0 0.0
    %2849 = vmatprep.subr.mxu0 0.0
    %2850 = vmatpush2.msra.mxu0 0.0
    %2851 = vmatprep.mubr.f32.mxu0 0.0
    %2852 = vmatmul.mubr.f32.gmra.mxu0 %v958
    %v2853 = vpop.f32.mrf.mxu0
    %v2854 = vadd.f32 %v2783, %v2853
    %v2855 = vpop.f32.mrf.mxu0
    %v2856 = vadd.f32 %v2785, %v2855
    %2857 = vdwg.mxu0
    %v2858 = vadd.f32 %v2618, %v2854
    %v2859 = vadd.f32 %v2619, %v2856
    %v2862 = vcombine.low %v2858, %v2859
    %2864 = vst [vmem:[#allocation4] sm:$0x77] %v2862
    %2865 = vst.msk [vmem:[#allocation2] sm:$0x7] %vm2033, %v1288
    // Predicated region
    $region34: #{tpu_custom_call.1} parent=1 // pred_check
      %p2866 = pneg %p28
    $region35: #{tpu_custom_call.1} parent=1 // pred_check_branch
      %2868 = sbr.rel (%p2866) target = $region37
    $region36: #{tpu_custom_call.1} parent=1 // pred_region
      %v2869 = vld [vmem:[#allocation3] sm:$0x7]
      %v2870 = vld [vmem:[%s4] sm:$0xff]
      %v2872 = vcombine.high %v2870, %v2870
      %v2874 = vsel %vm2038, %v2869, 0
      %v2876 = vsel %vm1243, %v2870, 0
      %v2878 = vsel %vm1243, %v2872, 0
      %2880 = vmatprep.subr.mxu0 0.0
      %2881 = vmatpush1.msra.mxu0 0.0
      %2882 = vmatprep.subr.mxu0 0.0
      %2883 = vmatpush1.msra.mxu0 0.0
      %2884 = vmatprep.subr.mxu0 0.0
      %2885 = vmatpush1.msra.mxu0 0.0
      %2886 = vmatprep.subr.mxu0 0.0
      %2887 = vmatpush1.msra.mxu0 0.0
      %2888 = vmatprep.subr.mxu0 0.0
      %2889 = vmatpush1.msra.mxu0 0.0
      %2890 = vmatprep.subr.mxu0 0.0
      %2891 = vmatpush1.msra.mxu0 0.0
      %2892 = vmatprep.subr.mxu0 0.0
      %2893 = vmatpush1.msra.mxu0 0.0
      %2894 = vmatprep.subr.mxu0 0.0
      %2895 = vmatpush1.msra.mxu0 0.0
      %2896 = vmatprep.subr.mxu0 0.0
      %2897 = vmatpush1.msra.mxu0 0.0
      %2898 = vmatprep.subr.mxu0 0.0
      %2899 = vmatpush1.msra.mxu0 0.0
      %2900 = vmatprep.subr.mxu0 0.0
      %2901 = vmatpush1.msra.mxu0 0.0
      %2902 = vmatprep.subr.mxu0 0.0
      %2903 = vmatpush1.msra.mxu0 0.0
      %2904 = vmatprep.subr.mxu0 0.0
      %2905 = vmatpush1.msra.mxu0 0.0
      %2906 = vmatprep.subr.mxu0 0.0
      %2907 = vmatpush1.msra.mxu0 0.0
      %2908 = vmatprep.subr.mxu0 0.0
      %2909 = vmatpush1.msra.mxu0 0.0
      %2910 = vmatprep.subr.mxu0 %v2878
      %2911 = vmatpush1.msra.mxu0 %v2876
      %2912 = vmatprep.subr.mxu0 0.0
      %2913 = vmatpush2.msra.mxu0 0.0
      %2914 = vmatprep.subr.mxu0 0.0
      %2915 = vmatpush2.msra.mxu0 0.0
      %2916 = vmatprep.subr.mxu0 0.0
      %2917 = vmatpush2.msra.mxu0 0.0
      %2918 = vmatprep.subr.mxu0 0.0
      %2919 = vmatpush2.msra.mxu0 0.0
      %2920 = vmatprep.subr.mxu0 0.0
      %2921 = vmatpush2.msra.mxu0 0.0
      %2922 = vmatprep.subr.mxu0 0.0
      %2923 = vmatpush2.msra.mxu0 0.0
      %2924 = vmatprep.subr.mxu0 0.0
      %2925 = vmatpush2.msra.mxu0 0.0
      %2926 = vmatprep.subr.mxu0 0.0
      %2927 = vmatpush2.msra.mxu0 0.0
      %2928 = vmatprep.subr.mxu0 0.0
      %2929 = vmatpush2.msra.mxu0 0.0
      %2930 = vmatprep.subr.mxu0 0.0
      %2931 = vmatpush2.msra.mxu0 0.0
      %2932 = vmatprep.subr.mxu0 0.0
      %2933 = vmatpush2.msra.mxu0 0.0
      %2934 = vmatprep.subr.mxu0 0.0
      %2935 = vmatpush2.msra.mxu0 0.0
      %2936 = vmatprep.subr.mxu0 0.0
      %2937 = vmatpush2.msra.mxu0 0.0
      %2938 = vmatprep.subr.mxu0 0.0
      %2939 = vmatpush2.msra.mxu0 0.0
      %2940 = vmatprep.subr.mxu0 0.0
      %2941 = vmatpush2.msra.mxu0 0.0
      %2942 = vmatprep.subr.mxu0 0.0
      %2943 = vmatpush2.msra.mxu0 0.0
      %2944 = vmatprep.mubr.f32.mxu0 0.0
      %2945 = vmatmul.mubr.f32.gmra.mxu0 %v2874
      %v2946 = vpop.f32.mrf.mxu0
      %v2947 = vadd.f32 0.0, %v2946
      %v2948 = vpop.f32.mrf.mxu0
      %v2949 = vadd.f32 0.0, %v2948
      %2950 = vdwg.mxu0
      %vm2951 = vcmp.gt.f32.partialorder %v2947, 0.0
      %vm2952 = vcmp.gt.f32.partialorder %v2949, 0.0
      %v2953 = vsel %vm2951, %v2947, 1.0
      %v2954 = vsel %vm2952, %v2949, 1.0
      %v2955 = vld [vmem:[#allocation4] sm:$0x77]
      %v2956 = vrcp.pop %v2953
      %v2957 = vrcp.pop %v2954
      %v2960 = vcombine.low %v2956, %v2957
      %v2962 = vmul.f32 %v2955, %v2960
      %v2964 = vcombine.high %v2962, %v2962
      %v2966 = vsel %vm1437, %v2962, 0.0
      %v2967 = vsel %vm1437, %v2964, 0.0
      %v2968 = vadd.f32 %v2966, %v2967
      %2969 = vadd.xlane.f32.xlu0 %v2968
      %v2970 = vpop.xlane.xlu0 %2969
      %v2971 = vrcp.pop 256.0
      %v2972 = vmul.f32 %v2970, %v2971
      %v2975 = vunpack.c.l.s4 839922192
      %v2976 = vunpack.c.0.s8 %v2975
      %v2977 = vlaneseq
      %v2978 = vshrl.u32 %v2977, 7
      %v2979 = vsub.s32 %v2976, %v2978
      %v2980 = vrot.slane %v2972, %v2979
      %v2982 = vsub.f32 %v2962, %v2980
      %v2983 = vmul.f32 %v2982, %v2982
      %v2985 = vcombine.high %v2983, %v2983
      %v2987 = vsel %vm1437, %v2983, 0.0
      %v2988 = vsel %vm1437, %v2985, 0.0
      %v2989 = vadd.f32 %v2987, %v2988
      %2990 = vadd.xlane.f32.xlu0 %v2989
      %v2991 = vpop.xlane.xlu0 %2990
      %v2992 = vmul.f32 %v2991, %v2971
      %v2993 = vadd.f32 %v2992, 1e-05
      %v2994 = vrsqrt.pop %v2993
      %v2997 = vunpack.c.l.s4 839922192
      %v2998 = vunpack.c.0.s8 %v2997
      %v2999 = vlaneseq
      %v3000 = vshrl.u32 %v2999, 7
      %v3001 = vsub.s32 %v2998, %v3000
      %v3002 = vrot.slane %v2994, %v3001
      %v3004 = vmul.f32 %v2982, %v3002
      %v3005 = vld [vmem:[%s5] sm:$0x3]
      %v3007 = vlaneseq
      %v3008 = vshrl.u32 %v3007, 7
      %v3009 = vsub.s32 0, %v3008
      %v3010 = vrot.slane %v3005, %v3009
      %v3011 = vlaneseq
      %v3012 = vshrl.u32 %v3011, 7
      %v3013 = vsub.s32 1, %v3012
      %v3014 = vrot.slane %v3005, %v3013
      %v3015 = vcombine.low %v3010, %v3014
      %v3017 = vmul.f32 %v3004, %v3015
      %v3018 = vld [vmem:[%s6] sm:$0x3]
      %v3020 = vlaneseq
      %v3021 = vshrl.u32 %v3020, 7
      %v3022 = vsub.s32 0, %v3021
      %v3023 = vrot.slane %v3018, %v3022
      %v3024 = vlaneseq
      %v3025 = vshrl.u32 %v3024, 7
      %v3026 = vsub.s32 1, %v3025
      %v3027 = vrot.slane %v3018, %v3026
      %v3028 = vcombine.low %v3023, %v3027
      %v3030 = vadd.f32 %v3017, %v3028
      %3031 = vst [vmem:[#allocation5] sm:$0x77] %v3030
    $region37: #{tpu_custom_call.1} parent=1 // pred_fallthru
      _
    // Predicated region
    $region38: #{tpu_custom_call.1} parent=1 // pred_check
      _
    $region39: #{tpu_custom_call.1} parent=1 // pred_check_branch
      %3033 = sbr.rel (0) target = $region41
    $region40: #{tpu_custom_call.1} parent=1 // pred_region
      %s3035 = ssub.s32 128, 128
      %3036 = vsyncadd [#allocation6], %s3035
      %s3038 = sshll.u32 [#allocation5], 4
      %s3039 = int_to_ptr.vmem [resolvable:$true] %s3038
      %3041 = dma.vmem_to_hbm [thread:$0]  %s3039, 128, %s7, [#allocation6]
    $region41: #{tpu_custom_call.1} parent=1 // pred_fallthru
      _
    // Predicated region
    $region42: #{tpu_custom_call.1} parent=1 // pred_check
      _
    $region43: #{tpu_custom_call.1} parent=1 // pred_check_branch
      %3043 = sbr.rel (0) target = $region45
    $region44: #{tpu_custom_call.1} parent=1 // pred_region
      %3044 = dma.done [#allocation6], 128
    $region45: #{tpu_custom_call.1} parent=1 // pred_fallthru
      _
    %3045 = vsyncpa [#allocation6], 1

</llo_original>
